<compile_context>
chip_gen: v5e
topology: v5e:2x2
jax: 0.10.0
libtpu: 0.0.40
codegen_flags: <defaults>
</compile_context>

<pallas_src>
import jax
import jax.numpy as jnp
from jax.experimental import pallas as pl
from jax.experimental.pallas import tpu as pltpu


def _round_up(x, m):
    return ((x + m - 1) // m) * m


def _encoder_kernel(ids_ref, m_ref, o_ref):
    """One batch tile of the fused SentenceEncoder forward.

    ids_ref: (tb, L)   int32  token ids for this batch tile
    m_ref:   (Vp, Hp)  f32    fused lookup table  M = E @ W.T + b  (lane/sublane padded)
    o_ref:   (tb, Hp)  f32    max-over-sequence output for this batch tile
    """
    tb, seq_len = ids_ref.shape
    vp, hp = m_ref.shape

    ids = ids_ref[...]            # (tb, L) int32
    table = m_ref[...]            # (Vp, Hp) f32, bias already folded in
    iota_v = jax.lax.broadcasted_iota(jnp.int32, (tb, vp), 1)

    def gather_rows(l):
        # One-hot row selector: exact gather of M[ids[:, l]] via the MXU.
        onehot = (ids[:, l:l + 1] == iota_v).astype(jnp.float32)          # (tb, Vp)
        return jnp.dot(onehot, table,
                       precision=jax.lax.Precision.HIGHEST,
                       preferred_element_type=jnp.float32)                # (tb, Hp)

    # Static unroll over the (small) max_length; running max keeps VMEM flat.
    acc = gather_rows(0)
    for l in range(1, seq_len):
        acc = jnp.maximum(acc, gather_rows(l))

    o_ref[...] = acc


def sentence_encoder_forward(token_ids, embedding_table, linear_w, linear_b,
                             *, max_block_b=2048):
    """token_ids: (B, L) int; embedding_table: (V, H); linear_w: (H, H) (out, in); linear_b: (H,)."""
    B, L = token_ids.shape
    V, H = embedding_table.shape
    Hp = _round_up(H, 128)                       # lane-dense output / MXU N
    Vp = _round_up(V, 128)                       # MXU-friendly contraction dim

    # ---- fuse Embedding + Linear (+ bias) into one f32 lookup table -------------------------
    fused = jnp.dot(embedding_table.astype(jnp.float32),
                    linear_w.T.astype(jnp.float32),
                    precision=jax.lax.Precision.HIGHEST) + linear_b[None, :].astype(jnp.float32)
    m_pad = jnp.zeros((Vp, Hp), jnp.float32).at[:V, :H].set(fused)

    # ---- batch tiling: >=2 tiles when possible (v7x megacore), big tiles for big batches ----
    Bp8 = _round_up(B, 8)
    if Bp8 >= 16:
        half = _round_up((Bp8 + 1) // 2, 8)
        block_b = min(_round_up(max_block_b, 8), half)
    else:
        block_b = Bp8
    Bp = _round_up(Bp8, block_b)

    ids = token_ids.astype(jnp.int32)
    if Bp != B:
        ids = jnp.zeros((Bp, L), jnp.int32).at[:B].set(ids)   # pad rows use id 0, sliced off below

    out = pl.pallas_call(
        _encoder_kernel,
        out_shape=jax.ShapeDtypeStruct((Bp, Hp), jnp.float32),
        grid_spec=pltpu.PrefetchScalarGridSpec(
            num_scalar_prefetch=0,
            grid=(Bp // block_b,),
            in_specs=[
                pl.BlockSpec((block_b, L), lambda i: (i, 0)),   # streamed token ids (tiny)
                pl.BlockSpec((Vp, Hp), lambda i: (0, 0)),       # resident fused table
            ],
            out_specs=pl.BlockSpec((block_b, Hp), lambda i: (i, 0)),
        ),
        compiler_params=pltpu.CompilerParams(
            dimension_semantics=("parallel",),   # shards batch tiles across the 2 TCs on v7x
        ),
    )(ids, m_pad)

    # Keep this slice: it drops both the lane padding and the batch-padding rows.
    return out[:B, :H]


def _reference(token_ids, embedding_table, linear_w, linear_b):
    emb = jnp.take(embedding_table, token_ids, axis=0)
    y = jnp.einsum("blh,oh->blo", emb, linear_w,
                   precision=jax.lax.Precision.HIGHEST) + linear_b[None, None, :]
    return jnp.max(y, axis=1)


if __name__ == "__main__":
    # Small config consistent with the module: hidden_size=32, vocab_size=20, max_length=8.
    hidden_size = 32
    vocab_size = 20
    max_length = 8
    B = 2

    key = jax.random.PRNGKey(0)
    k_emb, k_w, k_b, k_ids = jax.random.split(key, 4)

    # Embedding table (vocab_size + 1, H); padding_idx=0 -> zero row.
    emb_table = jax.random.normal(k_emb, (vocab_size + 1, hidden_size), dtype=jnp.float32) * 0.1
    emb_table = emb_table.at[0].set(0.0)

    # nn.Linear(H, H): weight (out, in), bias (out,)
    linear_w = jax.random.normal(k_w, (hidden_size, hidden_size), dtype=jnp.float32) * 0.1
    linear_b = jax.random.normal(k_b, (hidden_size,), dtype=jnp.float32) * 0.1

    # Token ids in [0, vocab_size], including some padding zeros at the tail.
    token_ids = jax.random.randint(k_ids, (B, max_length), 0, vocab_size + 1, dtype=jnp.int32)
    token_ids = token_ids.at[:, -2:].set(0)

    out = sentence_encoder_forward(token_ids, emb_table, linear_w, linear_b)
    out = jax.block_until_ready(out)

    ref = _reference(token_ids, emb_table, linear_w, linear_b)
    assert out.shape == (B, hidden_size), out.shape
    # Fully f32 path (fused table + exact one-hot gather) -> tight tolerance.
    assert jnp.allclose(out, ref, atol=2e-4, rtol=2e-4), float(jnp.max(jnp.abs(out - ref)))

    print("KERNEL_OK")
</pallas_src>

<mosaic_0001>
module attributes {stable_mosaic.version = 11 : i64} {
  func.func @_encoder_kernel(%arg0: i32, %arg1: memref<8x8xi32, #tpu.memory_space<vmem>>, %arg2: memref<128x128xf32, #tpu.memory_space<vmem>>, %arg3: memref<8x128xf32, #tpu.memory_space<vmem>>) attributes {dimension_semantics = [#tpu.dimension_semantics<parallel>], iteration_bounds = array<i64: 1>, scalar_prefetch = 0 : i64, scratch_operands = 0 : i64, tpu.core_type = #tpu.core_type<tc>, window_params = [{transform_indices = @transform_0, window_bounds = array<i64: 8, 8>}, {pipeline_mode = #tpu.pipeline_mode<synchronous>, transform_indices = @transform_1, window_bounds = array<i64: 128, 128>}, {transform_indices = @transform_2, window_bounds = array<i64: 8, 128>}]} {
    %c0 = arith.constant 0 : index
    %c0_0 = arith.constant 0 : index
    %0 = vector.load %arg1[%c0, %c0_0] : memref<8x8xi32, #tpu.memory_space<vmem>>, vector<8x8xi32>
    %c0_1 = arith.constant 0 : index
    %c0_2 = arith.constant 0 : index
    %1 = vector.load %arg2[%c0_1, %c0_2] : memref<128x128xf32, #tpu.memory_space<vmem>>, vector<128x128xf32>
    %2 = tpu.iota {dimensions = array<i32: 1>} : vector<8x128xi32>
    %3 = vector.extract_strided_slice %0 {offsets = [0, 0], sizes = [8, 1], strides = [1, 1]} : vector<8x8xi32> to vector<8x1xi32>
    %4 = vector.broadcast %3 : vector<8x1xi32> to vector<8x128xi32>
    %5 = arith.cmpi eq, %4, %2 : vector<8x128xi32>
    %6 = arith.extui %5 : vector<8x128xi1> to vector<8x128xi32>
    %7 = arith.sitofp %6 : vector<8x128xi32> to vector<8x128xf32>
    %cst = arith.constant dense<0.000000e+00> : vector<8x128xf32>
    %8 = tpu.matmul %7, %1, %cst {dimension_numbers = #tpu.dot_dimension_numbers<[1], [0], [0], [1], [0, 0, 1, 1], [], []>, precision = #tpu.contract_precision<fp32>} : vector<8x128xf32>, vector<128x128xf32>, vector<8x128xf32> -> vector<8x128xf32>
    %9 = vector.extract_strided_slice %0 {offsets = [0, 1], sizes = [8, 1], strides = [1, 1]} : vector<8x8xi32> to vector<8x1xi32>
    %10 = vector.broadcast %9 : vector<8x1xi32> to vector<8x128xi32>
    %11 = arith.cmpi eq, %10, %2 : vector<8x128xi32>
    %12 = arith.extui %11 : vector<8x128xi1> to vector<8x128xi32>
    %13 = arith.sitofp %12 : vector<8x128xi32> to vector<8x128xf32>
    %cst_3 = arith.constant dense<0.000000e+00> : vector<8x128xf32>
    %14 = tpu.matmul %13, %1, %cst_3 {dimension_numbers = #tpu.dot_dimension_numbers<[1], [0], [0], [1], [0, 0, 1, 1], [], []>, precision = #tpu.contract_precision<fp32>} : vector<8x128xf32>, vector<128x128xf32>, vector<8x128xf32> -> vector<8x128xf32>
    %15 = arith.maximumf %8, %14 : vector<8x128xf32>
    %16 = vector.extract_strided_slice %0 {offsets = [0, 2], sizes = [8, 1], strides = [1, 1]} : vector<8x8xi32> to vector<8x1xi32>
    %17 = vector.broadcast %16 : vector<8x1xi32> to vector<8x128xi32>
    %18 = arith.cmpi eq, %17, %2 : vector<8x128xi32>
    %19 = arith.extui %18 : vector<8x128xi1> to vector<8x128xi32>
    %20 = arith.sitofp %19 : vector<8x128xi32> to vector<8x128xf32>
    %cst_4 = arith.constant dense<0.000000e+00> : vector<8x128xf32>
    %21 = tpu.matmul %20, %1, %cst_4 {dimension_numbers = #tpu.dot_dimension_numbers<[1], [0], [0], [1], [0, 0, 1, 1], [], []>, precision = #tpu.contract_precision<fp32>} : vector<8x128xf32>, vector<128x128xf32>, vector<8x128xf32> -> vector<8x128xf32>
    %22 = arith.maximumf %15, %21 : vector<8x128xf32>
    %23 = vector.extract_strided_slice %0 {offsets = [0, 3], sizes = [8, 1], strides = [1, 1]} : vector<8x8xi32> to vector<8x1xi32>
    %24 = vector.broadcast %23 : vector<8x1xi32> to vector<8x128xi32>
    %25 = arith.cmpi eq, %24, %2 : vector<8x128xi32>
    %26 = arith.extui %25 : vector<8x128xi1> to vector<8x128xi32>
    %27 = arith.sitofp %26 : vector<8x128xi32> to vector<8x128xf32>
    %cst_5 = arith.constant dense<0.000000e+00> : vector<8x128xf32>
    %28 = tpu.matmul %27, %1, %cst_5 {dimension_numbers = #tpu.dot_dimension_numbers<[1], [0], [0], [1], [0, 0, 1, 1], [], []>, precision = #tpu.contract_precision<fp32>} : vector<8x128xf32>, vector<128x128xf32>, vector<8x128xf32> -> vector<8x128xf32>
    %29 = arith.maximumf %22, %28 : vector<8x128xf32>
    %30 = vector.extract_strided_slice %0 {offsets = [0, 4], sizes = [8, 1], strides = [1, 1]} : vector<8x8xi32> to vector<8x1xi32>
    %31 = vector.broadcast %30 : vector<8x1xi32> to vector<8x128xi32>
    %32 = arith.cmpi eq, %31, %2 : vector<8x128xi32>
    %33 = arith.extui %32 : vector<8x128xi1> to vector<8x128xi32>
    %34 = arith.sitofp %33 : vector<8x128xi32> to vector<8x128xf32>
    %cst_6 = arith.constant dense<0.000000e+00> : vector<8x128xf32>
    %35 = tpu.matmul %34, %1, %cst_6 {dimension_numbers = #tpu.dot_dimension_numbers<[1], [0], [0], [1], [0, 0, 1, 1], [], []>, precision = #tpu.contract_precision<fp32>} : vector<8x128xf32>, vector<128x128xf32>, vector<8x128xf32> -> vector<8x128xf32>
    %36 = arith.maximumf %29, %35 : vector<8x128xf32>
    %37 = vector.extract_strided_slice %0 {offsets = [0, 5], sizes = [8, 1], strides = [1, 1]} : vector<8x8xi32> to vector<8x1xi32>
    %38 = vector.broadcast %37 : vector<8x1xi32> to vector<8x128xi32>
    %39 = arith.cmpi eq, %38, %2 : vector<8x128xi32>
    %40 = arith.extui %39 : vector<8x128xi1> to vector<8x128xi32>
    %41 = arith.sitofp %40 : vector<8x128xi32> to vector<8x128xf32>
    %cst_7 = arith.constant dense<0.000000e+00> : vector<8x128xf32>
    %42 = tpu.matmul %41, %1, %cst_7 {dimension_numbers = #tpu.dot_dimension_numbers<[1], [0], [0], [1], [0, 0, 1, 1], [], []>, precision = #tpu.contract_precision<fp32>} : vector<8x128xf32>, vector<128x128xf32>, vector<8x128xf32> -> vector<8x128xf32>
    %43 = arith.maximumf %36, %42 : vector<8x128xf32>
    %44 = vector.extract_strided_slice %0 {offsets = [0, 6], sizes = [8, 1], strides = [1, 1]} : vector<8x8xi32> to vector<8x1xi32>
    %45 = vector.broadcast %44 : vector<8x1xi32> to vector<8x128xi32>
    %46 = arith.cmpi eq, %45, %2 : vector<8x128xi32>
    %47 = arith.extui %46 : vector<8x128xi1> to vector<8x128xi32>
    %48 = arith.sitofp %47 : vector<8x128xi32> to vector<8x128xf32>
    %cst_8 = arith.constant dense<0.000000e+00> : vector<8x128xf32>
    %49 = tpu.matmul %48, %1, %cst_8 {dimension_numbers = #tpu.dot_dimension_numbers<[1], [0], [0], [1], [0, 0, 1, 1], [], []>, precision = #tpu.contract_precision<fp32>} : vector<8x128xf32>, vector<128x128xf32>, vector<8x128xf32> -> vector<8x128xf32>
    %50 = arith.maximumf %43, %49 : vector<8x128xf32>
    %51 = vector.extract_strided_slice %0 {offsets = [0, 7], sizes = [8, 1], strides = [1, 1]} : vector<8x8xi32> to vector<8x1xi32>
    %52 = vector.broadcast %51 : vector<8x1xi32> to vector<8x128xi32>
    %53 = arith.cmpi eq, %52, %2 : vector<8x128xi32>
    %54 = arith.extui %53 : vector<8x128xi1> to vector<8x128xi32>
    %55 = arith.sitofp %54 : vector<8x128xi32> to vector<8x128xf32>
    %cst_9 = arith.constant dense<0.000000e+00> : vector<8x128xf32>
    %56 = tpu.matmul %55, %1, %cst_9 {dimension_numbers = #tpu.dot_dimension_numbers<[1], [0], [0], [1], [0, 0, 1, 1], [], []>, precision = #tpu.contract_precision<fp32>} : vector<8x128xf32>, vector<128x128xf32>, vector<8x128xf32> -> vector<8x128xf32>
    %57 = arith.maximumf %50, %56 : vector<8x128xf32>
    %c0_10 = arith.constant 0 : index
    %c0_11 = arith.constant 0 : index
    %58 = vector.load %arg3[%c0_10, %c0_11] : memref<8x128xf32, #tpu.memory_space<vmem>>, vector<8x128xf32>
    tpu.vector_store %arg3[%c0_10, %c0_11], %57 {strides = array<i32>} : memref<8x128xf32, #tpu.memory_space<vmem>>, vector<8x128xf32>,
    return
  }
  func.func @transform_0(%arg0: i32) -> (i32, i32) {
    %c0_i32 = arith.constant 0 : i32
    %c0_i32_0 = arith.constant 0 : i32
    return %arg0, %c0_i32 : i32, i32
  }
  func.func @transform_1(%arg0: i32) -> (i32, i32) {
    %c0_i32 = arith.constant 0 : i32
    %c0_i32_0 = arith.constant 0 : i32
    %c0_i32_1 = arith.constant 0 : i32
    return %c0_i32, %c0_i32_0 : i32, i32
  }
  func.func @transform_2(%arg0: i32) -> (i32, i32) {
    %c0_i32 = arith.constant 0 : i32
    %c0_i32_0 = arith.constant 0 : i32
    return %arg0, %c0_i32 : i32, i32
  }
}

</mosaic_0001>

<llo_original>
// kernel: tpu_custom_call.1
$region0: #{tpu_custom_call.1}
  #allocation0 [shape = 'u32[]', space=smem, size = 0x4, offset = 0x4, fixed_abs, tag = 'smem constant byte address 0x4 - core index']
  #allocation1 [shape = 'u32[72,128]{1,0:T(1,128)}', space=vmem, size = 0x9000, scoped, tag = 'internal scratch']
  %s0 = inlined_call_operand.hbm [shape: s32[8,8], index: 0, kind: input, shape index: {}]
  %s1 = inlined_call_operand.hbm [shape: f32[128,128], index: 1, kind: input, shape index: {}]
  %s2 = inlined_call_operand.hbm [shape: f32[8,128], index: 2, kind: output, shape index: {}]
  %s3 = sld [smem:[#allocation0]]
  $region26: #{tpu_custom_call.1} parent=0
    _
  %s5 = ssub.s32 1, %s3
  %s6 = scalar_select 0, %s5, %s3
  $region1: #{tpu_custom_call.1} parent=0
    #allocation2 [shape = 'u8[4096]{0}', space=vmem, size = 0x1000, scoped, tag = 'input window, operand 0, single buffered']
    #allocation3 [shape = 's32[1]{0}', space=sflag, size = 0x4, scoped, tag = 'scoped memory for tpu_custom_call.1']
    #allocation4 [shape = 's32[1]{0}', space=sflag, size = 0x4, scoped, tag = 'scoped memory for tpu_custom_call.1']
    #allocation5 [shape = 'u8[65536]{0}', space=vmem, size = 0x10000, scoped, tag = 'input window, operand 1, single buffered']
    #allocation6 [shape = 's32[1]{0}', space=sflag, size = 0x4, scoped, tag = 'scoped memory for tpu_custom_call.1']
    #allocation7 [shape = 'u8[4096]{0}', space=vmem, size = 0x1000, scoped, tag = 'output window, operand 0, single buffered']
    %7 = vsyncpa [#allocation3], 0
    %8 = vsyncpa [#allocation6], 0
    %9 = vsyncpa [#allocation4], 0
    // Predicated region
    $region2: #{tpu_custom_call.1} parent=1 // pred_check
      _
    $region3: #{tpu_custom_call.1} parent=1 // pred_check_branch
      %11 = sbr.rel (0) target = $region5
    $region4: #{tpu_custom_call.1} parent=1 // pred_region
      %13 = vsyncadd [#allocation3], 0
      %s15 = sshll.u32 %s0, 4
      %s16 = int_to_ptr.hbm [resolvable:$true] %s15
      %s17 = sshll.u32 [#allocation2], 4
      %s18 = int_to_ptr.vmem [resolvable:$true] %s17
      %20 = dma.hbm_to_vmem [thread:$0]  %s16, 128, %s18, [#allocation3]
    $region5: #{tpu_custom_call.1} parent=1 // pred_fallthru
      _
    // Predicated region
    $region6: #{tpu_custom_call.1} parent=1 // pred_check
      _
    $region7: #{tpu_custom_call.1} parent=1 // pred_check_branch
      %22 = sbr.rel (0) target = $region9
    $region8: #{tpu_custom_call.1} parent=1 // pred_region
      %24 = vsyncadd [#allocation6], 0
      %s25 = sshll.u32 %s1, 4
      %s26 = int_to_ptr.hbm [resolvable:$true] %s25
      %s27 = sshll.u32 [#allocation5], 4
      %s28 = int_to_ptr.vmem [resolvable:$true] %s27
      %33 = dma.hbm_to_vmem [thread:$0]  %s26, 2048, %s28, [#allocation6], 128, 128, 8
    $region9: #{tpu_custom_call.1} parent=1 // pred_fallthru
      _
    // Predicated region
    $region10: #{tpu_custom_call.1} parent=1 // pred_check
      _
    $region11: #{tpu_custom_call.1} parent=1 // pred_check_branch
      %35 = sbr.rel (0) target = $region13
    $region12: #{tpu_custom_call.1} parent=1 // pred_region
      %37 = dma.done [#allocation3], 128
    $region13: #{tpu_custom_call.1} parent=1 // pred_fallthru
      _
    // Predicated region
    $region14: #{tpu_custom_call.1} parent=1 // pred_check
      _
    $region15: #{tpu_custom_call.1} parent=1 // pred_check_branch
      %39 = sbr.rel (0) target = $region17
    $region16: #{tpu_custom_call.1} parent=1 // pred_region
      %41 = dma.done [#allocation6], 2048
    $region17: #{tpu_custom_call.1} parent=1 // pred_fallthru
      _
    %v42 = vld [vmem:[#allocation2] sm:$0xff]
    %v43 = vld [vmem:[#allocation5] sm:$0xff]
    %v44 = vld [vmem:[#allocation5 + $0x8] sm:$0xff]
    %v45 = vld [vmem:[#allocation5 + $0x10] sm:$0xff]
    %v46 = vld [vmem:[#allocation5 + $0x18] sm:$0xff]
    %v47 = vld [vmem:[#allocation5 + $0x20] sm:$0xff]
    %v48 = vld [vmem:[#allocation5 + $0x28] sm:$0xff]
    %v49 = vld [vmem:[#allocation5 + $0x30] sm:$0xff]
    %v50 = vld [vmem:[#allocation5 + $0x38] sm:$0xff]
    %v51 = vld [vmem:[#allocation5 + $0x40] sm:$0xff]
    %v52 = vld [vmem:[#allocation5 + $0x48] sm:$0xff]
    %v53 = vld [vmem:[#allocation5 + $0x50] sm:$0xff]
    %v54 = vld [vmem:[#allocation5 + $0x58] sm:$0xff]
    %v55 = vld [vmem:[#allocation5 + $0x60] sm:$0xff]
    %v56 = vld [vmem:[#allocation5 + $0x68] sm:$0xff]
    %v57 = vld [vmem:[#allocation5 + $0x70] sm:$0xff]
    %v58 = vld [vmem:[#allocation5 + $0x78] sm:$0xff]
    %v59 = vlaneseq
    %v60 = vand.u32 %v59, 127
    %61 = vset.pattern.permute.xlu0 0
    %62 = vperm.xlu0 %61, %v42
    %v63 = vpop.permute.xlu0 %62
    %vm64 = vcmp.eq.s32.totalorder %v63, %v60
    %v65 = vsel %vm64, 1, 0
    %v66 = vcvt.s32.f32 %v65
    %v67 = vand.u32 %v58, 4294901760
    %68 = vmatpush.msra.mxu0 %v67
    %v69 = vand.u32 %v57, 4294901760
    %70 = vmatpush.msra.mxu0 %v69
    %v71 = vand.u32 %v56, 4294901760
    %72 = vmatpush.msra.mxu0 %v71
    %v73 = vand.u32 %v55, 4294901760
    %74 = vmatpush.msra.mxu0 %v73
    %v75 = vand.u32 %v54, 4294901760
    %76 = vmatpush.msra.mxu0 %v75
    %v77 = vand.u32 %v53, 4294901760
    %78 = vmatpush.msra.mxu0 %v77
    %v79 = vand.u32 %v52, 4294901760
    %80 = vmatpush.msra.mxu0 %v79
    %v81 = vand.u32 %v51, 4294901760
    %82 = vmatpush.msra.mxu0 %v81
    %v83 = vand.u32 %v50, 4294901760
    %84 = vmatpush.msra.mxu0 %v83
    %v85 = vand.u32 %v49, 4294901760
    %86 = vmatpush.msra.mxu0 %v85
    %v87 = vand.u32 %v48, 4294901760
    %88 = vmatpush.msra.mxu0 %v87
    %v89 = vand.u32 %v47, 4294901760
    %90 = vmatpush.msra.mxu0 %v89
    %v91 = vand.u32 %v46, 4294901760
    %92 = vmatpush.msra.mxu0 %v91
    %v93 = vand.u32 %v45, 4294901760
    %94 = vmatpush.msra.mxu0 %v93
    %v95 = vand.u32 %v44, 4294901760
    %96 = vmatpush.msra.mxu0 %v95
    %v97 = vand.u32 %v43, 4294901760
    %98 = vmatpush.msra.mxu0 %v97
    %v99 = vand.u32 %v66, 4294901760
    %v100 = vsub.f32 %v66, %v99
    %v101 = vand.u32 %v100, 4294901760
    %v102 = vsub.f32 %v100, %v101
    %v103 = vand.u32 %v102, 4294901760
    %104 = vmatmul.f32.gmra.mxu0 %v103
    %v105 = vpop.f32.mrf.mxu0
    %v106 = vadd.f32 0.0, %v105
    %107 = vdwg.mxu0
    %v108 = vand.u32 %v58, 4294901760
    %v109 = vsub.f32 %v58, %v108
    %v110 = vand.u32 %v109, 4294901760
    %v111 = vsub.f32 %v109, %v110
    %v112 = vand.u32 %v111, 4294901760
    %113 = vmatpush.msra.mxu0 %v112
    %v114 = vand.u32 %v57, 4294901760
    %v115 = vsub.f32 %v57, %v114
    %v116 = vand.u32 %v115, 4294901760
    %v117 = vsub.f32 %v115, %v116
    %v118 = vand.u32 %v117, 4294901760
    %119 = vmatpush.msra.mxu0 %v118
    %v120 = vand.u32 %v56, 4294901760
    %v121 = vsub.f32 %v56, %v120
    %v122 = vand.u32 %v121, 4294901760
    %v123 = vsub.f32 %v121, %v122
    %v124 = vand.u32 %v123, 4294901760
    %125 = vmatpush.msra.mxu0 %v124
    %v126 = vand.u32 %v55, 4294901760
    %v127 = vsub.f32 %v55, %v126
    %v128 = vand.u32 %v127, 4294901760
    %v129 = vsub.f32 %v127, %v128
    %v130 = vand.u32 %v129, 4294901760
    %131 = vmatpush.msra.mxu0 %v130
    %v132 = vand.u32 %v54, 4294901760
    %v133 = vsub.f32 %v54, %v132
    %v134 = vand.u32 %v133, 4294901760
    %v135 = vsub.f32 %v133, %v134
    %v136 = vand.u32 %v135, 4294901760
    %137 = vmatpush.msra.mxu0 %v136
    %v138 = vand.u32 %v53, 4294901760
    %v139 = vsub.f32 %v53, %v138
    %v140 = vand.u32 %v139, 4294901760
    %v141 = vsub.f32 %v139, %v140
    %v142 = vand.u32 %v141, 4294901760
    %143 = vmatpush.msra.mxu0 %v142
    %v144 = vand.u32 %v52, 4294901760
    %v145 = vsub.f32 %v52, %v144
    %v146 = vand.u32 %v145, 4294901760
    %v147 = vsub.f32 %v145, %v146
    %v148 = vand.u32 %v147, 4294901760
    %149 = vmatpush.msra.mxu0 %v148
    %v150 = vand.u32 %v51, 4294901760
    %v151 = vsub.f32 %v51, %v150
    %v152 = vand.u32 %v151, 4294901760
    %v153 = vsub.f32 %v151, %v152
    %v154 = vand.u32 %v153, 4294901760
    %155 = vmatpush.msra.mxu0 %v154
    %v156 = vand.u32 %v50, 4294901760
    %v157 = vsub.f32 %v50, %v156
    %v158 = vand.u32 %v157, 4294901760
    %v159 = vsub.f32 %v157, %v158
    %v160 = vand.u32 %v159, 4294901760
    %161 = vmatpush.msra.mxu0 %v160
    %v162 = vand.u32 %v49, 4294901760
    %v163 = vsub.f32 %v49, %v162
    %v164 = vand.u32 %v163, 4294901760
    %v165 = vsub.f32 %v163, %v164
    %v166 = vand.u32 %v165, 4294901760
    %167 = vmatpush.msra.mxu0 %v166
    %v168 = vand.u32 %v48, 4294901760
    %v169 = vsub.f32 %v48, %v168
    %v170 = vand.u32 %v169, 4294901760
    %v171 = vsub.f32 %v169, %v170
    %v172 = vand.u32 %v171, 4294901760
    %173 = vmatpush.msra.mxu0 %v172
    %v174 = vand.u32 %v47, 4294901760
    %v175 = vsub.f32 %v47, %v174
    %v176 = vand.u32 %v175, 4294901760
    %v177 = vsub.f32 %v175, %v176
    %v178 = vand.u32 %v177, 4294901760
    %179 = vmatpush.msra.mxu0 %v178
    %v180 = vand.u32 %v46, 4294901760
    %v181 = vsub.f32 %v46, %v180
    %v182 = vand.u32 %v181, 4294901760
    %v183 = vsub.f32 %v181, %v182
    %v184 = vand.u32 %v183, 4294901760
    %185 = vmatpush.msra.mxu0 %v184
    %v186 = vand.u32 %v45, 4294901760
    %v187 = vsub.f32 %v45, %v186
    %v188 = vand.u32 %v187, 4294901760
    %v189 = vsub.f32 %v187, %v188
    %v190 = vand.u32 %v189, 4294901760
    %191 = vmatpush.msra.mxu0 %v190
    %v192 = vand.u32 %v44, 4294901760
    %v193 = vsub.f32 %v44, %v192
    %v194 = vand.u32 %v193, 4294901760
    %v195 = vsub.f32 %v193, %v194
    %v196 = vand.u32 %v195, 4294901760
    %197 = vmatpush.msra.mxu0 %v196
    %v198 = vand.u32 %v43, 4294901760
    %v199 = vsub.f32 %v43, %v198
    %v200 = vand.u32 %v199, 4294901760
    %v201 = vsub.f32 %v199, %v200
    %v202 = vand.u32 %v201, 4294901760
    %203 = vmatpush.msra.mxu0 %v202
    %v204 = vand.u32 %v66, 4294901760
    %205 = vmatmul.f32.gmra.mxu0 %v204
    %v206 = vpop.f32.mrf.mxu0
    %v207 = vadd.f32 %v106, %v206
    %208 = vdwg.mxu0
    %v209 = vand.u32 %v58, 4294901760
    %v210 = vsub.f32 %v58, %v209
    %211 = vmatpush.msra.mxu0 %v210
    %v212 = vand.u32 %v57, 4294901760
    %v213 = vsub.f32 %v57, %v212
    %214 = vmatpush.msra.mxu0 %v213
    %v215 = vand.u32 %v56, 4294901760
    %v216 = vsub.f32 %v56, %v215
    %217 = vmatpush.msra.mxu0 %v216
    %v218 = vand.u32 %v55, 4294901760
    %v219 = vsub.f32 %v55, %v218
    %220 = vmatpush.msra.mxu0 %v219
    %v221 = vand.u32 %v54, 4294901760
    %v222 = vsub.f32 %v54, %v221
    %223 = vmatpush.msra.mxu0 %v222
    %v224 = vand.u32 %v53, 4294901760
    %v225 = vsub.f32 %v53, %v224
    %226 = vmatpush.msra.mxu0 %v225
    %v227 = vand.u32 %v52, 4294901760
    %v228 = vsub.f32 %v52, %v227
    %229 = vmatpush.msra.mxu0 %v228
    %v230 = vand.u32 %v51, 4294901760
    %v231 = vsub.f32 %v51, %v230
    %232 = vmatpush.msra.mxu0 %v231
    %v233 = vand.u32 %v50, 4294901760
    %v234 = vsub.f32 %v50, %v233
    %235 = vmatpush.msra.mxu0 %v234
    %v236 = vand.u32 %v49, 4294901760
    %v237 = vsub.f32 %v49, %v236
    %238 = vmatpush.msra.mxu0 %v237
    %v239 = vand.u32 %v48, 4294901760
    %v240 = vsub.f32 %v48, %v239
    %241 = vmatpush.msra.mxu0 %v240
    %v242 = vand.u32 %v47, 4294901760
    %v243 = vsub.f32 %v47, %v242
    %244 = vmatpush.msra.mxu0 %v243
    %v245 = vand.u32 %v46, 4294901760
    %v246 = vsub.f32 %v46, %v245
    %247 = vmatpush.msra.mxu0 %v246
    %v248 = vand.u32 %v45, 4294901760
    %v249 = vsub.f32 %v45, %v248
    %250 = vmatpush.msra.mxu0 %v249
    %v251 = vand.u32 %v44, 4294901760
    %v252 = vsub.f32 %v44, %v251
    %253 = vmatpush.msra.mxu0 %v252
    %v254 = vand.u32 %v43, 4294901760
    %v255 = vsub.f32 %v43, %v254
    %256 = vmatpush.msra.mxu0 %v255
    %v257 = vand.u32 %v66, 4294901760
    %v258 = vsub.f32 %v66, %v257
    %259 = vmatmul.f32.gmra.mxu0 %v258
    %v260 = vpop.f32.mrf.mxu0
    %v261 = vadd.f32 %v207, %v260
    %262 = vdwg.mxu0
    %v263 = vand.u32 %v58, 4294901760
    %264 = vmatpush.msra.mxu0 %v263
    %v265 = vand.u32 %v57, 4294901760
    %266 = vmatpush.msra.mxu0 %v265
    %v267 = vand.u32 %v56, 4294901760
    %268 = vmatpush.msra.mxu0 %v267
    %v269 = vand.u32 %v55, 4294901760
    %270 = vmatpush.msra.mxu0 %v269
    %v271 = vand.u32 %v54, 4294901760
    %272 = vmatpush.msra.mxu0 %v271
    %v273 = vand.u32 %v53, 4294901760
    %274 = vmatpush.msra.mxu0 %v273
    %v275 = vand.u32 %v52, 4294901760
    %276 = vmatpush.msra.mxu0 %v275
    %v277 = vand.u32 %v51, 4294901760
    %278 = vmatpush.msra.mxu0 %v277
    %v279 = vand.u32 %v50, 4294901760
    %280 = vmatpush.msra.mxu0 %v279
    %v281 = vand.u32 %v49, 4294901760
    %282 = vmatpush.msra.mxu0 %v281
    %v283 = vand.u32 %v48, 4294901760
    %284 = vmatpush.msra.mxu0 %v283
    %v285 = vand.u32 %v47, 4294901760
    %286 = vmatpush.msra.mxu0 %v285
    %v287 = vand.u32 %v46, 4294901760
    %288 = vmatpush.msra.mxu0 %v287
    %v289 = vand.u32 %v45, 4294901760
    %290 = vmatpush.msra.mxu0 %v289
    %v291 = vand.u32 %v44, 4294901760
    %292 = vmatpush.msra.mxu0 %v291
    %v293 = vand.u32 %v43, 4294901760
    %294 = vmatpush.msra.mxu0 %v293
    %v295 = vand.u32 %v66, 4294901760
    %v296 = vsub.f32 %v66, %v295
    %v297 = vand.u32 %v296, 4294901760
    %298 = vmatmul.f32.gmra.mxu0 %v297
    %v299 = vpop.f32.mrf.mxu0
    %v300 = vadd.f32 %v261, %v299
    %301 = vdwg.mxu0
    %v302 = vand.u32 %v58, 4294901760
    %v303 = vsub.f32 %v58, %v302
    %v304 = vand.u32 %v303, 4294901760
    %305 = vmatpush.msra.mxu0 %v304
    %v306 = vand.u32 %v57, 4294901760
    %v307 = vsub.f32 %v57, %v306
    %v308 = vand.u32 %v307, 4294901760
    %309 = vmatpush.msra.mxu0 %v308
    %v310 = vand.u32 %v56, 4294901760
    %v311 = vsub.f32 %v56, %v310
    %v312 = vand.u32 %v311, 4294901760
    %313 = vmatpush.msra.mxu0 %v312
    %v314 = vand.u32 %v55, 4294901760
    %v315 = vsub.f32 %v55, %v314
    %v316 = vand.u32 %v315, 4294901760
    %317 = vmatpush.msra.mxu0 %v316
    %v318 = vand.u32 %v54, 4294901760
    %v319 = vsub.f32 %v54, %v318
    %v320 = vand.u32 %v319, 4294901760
    %321 = vmatpush.msra.mxu0 %v320
    %v322 = vand.u32 %v53, 4294901760
    %v323 = vsub.f32 %v53, %v322
    %v324 = vand.u32 %v323, 4294901760
    %325 = vmatpush.msra.mxu0 %v324
    %v326 = vand.u32 %v52, 4294901760
    %v327 = vsub.f32 %v52, %v326
    %v328 = vand.u32 %v327, 4294901760
    %329 = vmatpush.msra.mxu0 %v328
    %v330 = vand.u32 %v51, 4294901760
    %v331 = vsub.f32 %v51, %v330
    %v332 = vand.u32 %v331, 4294901760
    %333 = vmatpush.msra.mxu0 %v332
    %v334 = vand.u32 %v50, 4294901760
    %v335 = vsub.f32 %v50, %v334
    %v336 = vand.u32 %v335, 4294901760
    %337 = vmatpush.msra.mxu0 %v336
    %v338 = vand.u32 %v49, 4294901760
    %v339 = vsub.f32 %v49, %v338
    %v340 = vand.u32 %v339, 4294901760
    %341 = vmatpush.msra.mxu0 %v340
    %v342 = vand.u32 %v48, 4294901760
    %v343 = vsub.f32 %v48, %v342
    %v344 = vand.u32 %v343, 4294901760
    %345 = vmatpush.msra.mxu0 %v344
    %v346 = vand.u32 %v47, 4294901760
    %v347 = vsub.f32 %v47, %v346
    %v348 = vand.u32 %v347, 4294901760
    %349 = vmatpush.msra.mxu0 %v348
    %v350 = vand.u32 %v46, 4294901760
    %v351 = vsub.f32 %v46, %v350
    %v352 = vand.u32 %v351, 4294901760
    %353 = vmatpush.msra.mxu0 %v352
    %v354 = vand.u32 %v45, 4294901760
    %v355 = vsub.f32 %v45, %v354
    %v356 = vand.u32 %v355, 4294901760
    %357 = vmatpush.msra.mxu0 %v356
    %v358 = vand.u32 %v44, 4294901760
    %v359 = vsub.f32 %v44, %v358
    %v360 = vand.u32 %v359, 4294901760
    %361 = vmatpush.msra.mxu0 %v360
    %v362 = vand.u32 %v43, 4294901760
    %v363 = vsub.f32 %v43, %v362
    %v364 = vand.u32 %v363, 4294901760
    %365 = vmatpush.msra.mxu0 %v364
    %v366 = vand.u32 %v66, 4294901760
    %367 = vmatmul.f32.gmra.mxu0 %v366
    %v368 = vpop.f32.mrf.mxu0
    %v369 = vadd.f32 %v300, %v368
    %370 = vdwg.mxu0
    %v371 = vand.u32 %v58, 4294901760
    %372 = vmatpush.msra.mxu0 %v371
    %v373 = vand.u32 %v57, 4294901760
    %374 = vmatpush.msra.mxu0 %v373
    %v375 = vand.u32 %v56, 4294901760
    %376 = vmatpush.msra.mxu0 %v375
    %v377 = vand.u32 %v55, 4294901760
    %378 = vmatpush.msra.mxu0 %v377
    %v379 = vand.u32 %v54, 4294901760
    %380 = vmatpush.msra.mxu0 %v379
    %v381 = vand.u32 %v53, 4294901760
    %382 = vmatpush.msra.mxu0 %v381
    %v383 = vand.u32 %v52, 4294901760
    %384 = vmatpush.msra.mxu0 %v383
    %v385 = vand.u32 %v51, 4294901760
    %386 = vmatpush.msra.mxu0 %v385
    %v387 = vand.u32 %v50, 4294901760
    %388 = vmatpush.msra.mxu0 %v387
    %v389 = vand.u32 %v49, 4294901760
    %390 = vmatpush.msra.mxu0 %v389
    %v391 = vand.u32 %v48, 4294901760
    %392 = vmatpush.msra.mxu0 %v391
    %v393 = vand.u32 %v47, 4294901760
    %394 = vmatpush.msra.mxu0 %v393
    %v395 = vand.u32 %v46, 4294901760
    %396 = vmatpush.msra.mxu0 %v395
    %v397 = vand.u32 %v45, 4294901760
    %398 = vmatpush.msra.mxu0 %v397
    %v399 = vand.u32 %v44, 4294901760
    %400 = vmatpush.msra.mxu0 %v399
    %v401 = vand.u32 %v43, 4294901760
    %402 = vmatpush.msra.mxu0 %v401
    %v403 = vand.u32 %v66, 4294901760
    %404 = vmatmul.f32.gmra.mxu0 %v403
    %v405 = vpop.f32.mrf.mxu0
    %v406 = vadd.f32 %v369, %v405
    %407 = vdwg.mxu0
    %408 = vset.pattern.permute.xlu0 1
    %409 = vperm.xlu0 %408, %v42
    %v410 = vpop.permute.xlu0 %409
    %vm411 = vcmp.eq.s32.totalorder %v410, %v60
    %v412 = vsel %vm411, 1, 0
    %v413 = vcvt.s32.f32 %v412
    %v414 = vand.u32 %v58, 4294901760
    %415 = vmatpush.msra.mxu0 %v414
    %v416 = vand.u32 %v57, 4294901760
    %417 = vmatpush.msra.mxu0 %v416
    %v418 = vand.u32 %v56, 4294901760
    %419 = vmatpush.msra.mxu0 %v418
    %v420 = vand.u32 %v55, 4294901760
    %421 = vmatpush.msra.mxu0 %v420
    %v422 = vand.u32 %v54, 4294901760
    %423 = vmatpush.msra.mxu0 %v422
    %v424 = vand.u32 %v53, 4294901760
    %425 = vmatpush.msra.mxu0 %v424
    %v426 = vand.u32 %v52, 4294901760
    %427 = vmatpush.msra.mxu0 %v426
    %v428 = vand.u32 %v51, 4294901760
    %429 = vmatpush.msra.mxu0 %v428
    %v430 = vand.u32 %v50, 4294901760
    %431 = vmatpush.msra.mxu0 %v430
    %v432 = vand.u32 %v49, 4294901760
    %433 = vmatpush.msra.mxu0 %v432
    %v434 = vand.u32 %v48, 4294901760
    %435 = vmatpush.msra.mxu0 %v434
    %v436 = vand.u32 %v47, 4294901760
    %437 = vmatpush.msra.mxu0 %v436
    %v438 = vand.u32 %v46, 4294901760
    %439 = vmatpush.msra.mxu0 %v438
    %v440 = vand.u32 %v45, 4294901760
    %441 = vmatpush.msra.mxu0 %v440
    %v442 = vand.u32 %v44, 4294901760
    %443 = vmatpush.msra.mxu0 %v442
    %v444 = vand.u32 %v43, 4294901760
    %445 = vmatpush.msra.mxu0 %v444
    %v446 = vand.u32 %v413, 4294901760
    %v447 = vsub.f32 %v413, %v446
    %v448 = vand.u32 %v447, 4294901760
    %v449 = vsub.f32 %v447, %v448
    %v450 = vand.u32 %v449, 4294901760
    %451 = vmatmul.f32.gmra.mxu0 %v450
    %v452 = vpop.f32.mrf.mxu0
    %v453 = vadd.f32 0.0, %v452
    %454 = vdwg.mxu0
    %v455 = vand.u32 %v58, 4294901760
    %v456 = vsub.f32 %v58, %v455
    %v457 = vand.u32 %v456, 4294901760
    %v458 = vsub.f32 %v456, %v457
    %v459 = vand.u32 %v458, 4294901760
    %460 = vmatpush.msra.mxu0 %v459
    %v461 = vand.u32 %v57, 4294901760
    %v462 = vsub.f32 %v57, %v461
    %v463 = vand.u32 %v462, 4294901760
    %v464 = vsub.f32 %v462, %v463
    %v465 = vand.u32 %v464, 4294901760
    %466 = vmatpush.msra.mxu0 %v465
    %v467 = vand.u32 %v56, 4294901760
    %v468 = vsub.f32 %v56, %v467
    %v469 = vand.u32 %v468, 4294901760
    %v470 = vsub.f32 %v468, %v469
    %v471 = vand.u32 %v470, 4294901760
    %472 = vmatpush.msra.mxu0 %v471
    %v473 = vand.u32 %v55, 4294901760
    %v474 = vsub.f32 %v55, %v473
    %v475 = vand.u32 %v474, 4294901760
    %v476 = vsub.f32 %v474, %v475
    %v477 = vand.u32 %v476, 4294901760
    %478 = vmatpush.msra.mxu0 %v477
    %v479 = vand.u32 %v54, 4294901760
    %v480 = vsub.f32 %v54, %v479
    %v481 = vand.u32 %v480, 4294901760
    %v482 = vsub.f32 %v480, %v481
    %v483 = vand.u32 %v482, 4294901760
    %484 = vmatpush.msra.mxu0 %v483
    %v485 = vand.u32 %v53, 4294901760
    %v486 = vsub.f32 %v53, %v485
    %v487 = vand.u32 %v486, 4294901760
    %v488 = vsub.f32 %v486, %v487
    %v489 = vand.u32 %v488, 4294901760
    %490 = vmatpush.msra.mxu0 %v489
    %v491 = vand.u32 %v52, 4294901760
    %v492 = vsub.f32 %v52, %v491
    %v493 = vand.u32 %v492, 4294901760
    %v494 = vsub.f32 %v492, %v493
    %v495 = vand.u32 %v494, 4294901760
    %496 = vmatpush.msra.mxu0 %v495
    %v497 = vand.u32 %v51, 4294901760
    %v498 = vsub.f32 %v51, %v497
    %v499 = vand.u32 %v498, 4294901760
    %v500 = vsub.f32 %v498, %v499
    %v501 = vand.u32 %v500, 4294901760
    %502 = vmatpush.msra.mxu0 %v501
    %v503 = vand.u32 %v50, 4294901760
    %v504 = vsub.f32 %v50, %v503
    %v505 = vand.u32 %v504, 4294901760
    %v506 = vsub.f32 %v504, %v505
    %v507 = vand.u32 %v506, 4294901760
    %508 = vmatpush.msra.mxu0 %v507
    %v509 = vand.u32 %v49, 4294901760
    %v510 = vsub.f32 %v49, %v509
    %v511 = vand.u32 %v510, 4294901760
    %v512 = vsub.f32 %v510, %v511
    %v513 = vand.u32 %v512, 4294901760
    %514 = vmatpush.msra.mxu0 %v513
    %v515 = vand.u32 %v48, 4294901760
    %v516 = vsub.f32 %v48, %v515
    %v517 = vand.u32 %v516, 4294901760
    %v518 = vsub.f32 %v516, %v517
    %v519 = vand.u32 %v518, 4294901760
    %520 = vmatpush.msra.mxu0 %v519
    %v521 = vand.u32 %v47, 4294901760
    %v522 = vsub.f32 %v47, %v521
    %v523 = vand.u32 %v522, 4294901760
    %v524 = vsub.f32 %v522, %v523
    %v525 = vand.u32 %v524, 4294901760
    %526 = vmatpush.msra.mxu0 %v525
    %v527 = vand.u32 %v46, 4294901760
    %v528 = vsub.f32 %v46, %v527
    %v529 = vand.u32 %v528, 4294901760
    %v530 = vsub.f32 %v528, %v529
    %v531 = vand.u32 %v530, 4294901760
    %532 = vmatpush.msra.mxu0 %v531
    %v533 = vand.u32 %v45, 4294901760
    %v534 = vsub.f32 %v45, %v533
    %v535 = vand.u32 %v534, 4294901760
    %v536 = vsub.f32 %v534, %v535
    %v537 = vand.u32 %v536, 4294901760
    %538 = vmatpush.msra.mxu0 %v537
    %v539 = vand.u32 %v44, 4294901760
    %v540 = vsub.f32 %v44, %v539
    %v541 = vand.u32 %v540, 4294901760
    %v542 = vsub.f32 %v540, %v541
    %v543 = vand.u32 %v542, 4294901760
    %544 = vmatpush.msra.mxu0 %v543
    %v545 = vand.u32 %v43, 4294901760
    %v546 = vsub.f32 %v43, %v545
    %v547 = vand.u32 %v546, 4294901760
    %v548 = vsub.f32 %v546, %v547
    %v549 = vand.u32 %v548, 4294901760
    %550 = vmatpush.msra.mxu0 %v549
    %v551 = vand.u32 %v413, 4294901760
    %552 = vmatmul.f32.gmra.mxu0 %v551
    %v553 = vpop.f32.mrf.mxu0
    %v554 = vadd.f32 %v453, %v553
    %555 = vdwg.mxu0
    %v556 = vand.u32 %v58, 4294901760
    %v557 = vsub.f32 %v58, %v556
    %558 = vmatpush.msra.mxu0 %v557
    %v559 = vand.u32 %v57, 4294901760
    %v560 = vsub.f32 %v57, %v559
    %561 = vmatpush.msra.mxu0 %v560
    %v562 = vand.u32 %v56, 4294901760
    %v563 = vsub.f32 %v56, %v562
    %564 = vmatpush.msra.mxu0 %v563
    %v565 = vand.u32 %v55, 4294901760
    %v566 = vsub.f32 %v55, %v565
    %567 = vmatpush.msra.mxu0 %v566
    %v568 = vand.u32 %v54, 4294901760
    %v569 = vsub.f32 %v54, %v568
    %570 = vmatpush.msra.mxu0 %v569
    %v571 = vand.u32 %v53, 4294901760
    %v572 = vsub.f32 %v53, %v571
    %573 = vmatpush.msra.mxu0 %v572
    %v574 = vand.u32 %v52, 4294901760
    %v575 = vsub.f32 %v52, %v574
    %576 = vmatpush.msra.mxu0 %v575
    %v577 = vand.u32 %v51, 4294901760
    %v578 = vsub.f32 %v51, %v577
    %579 = vmatpush.msra.mxu0 %v578
    %v580 = vand.u32 %v50, 4294901760
    %v581 = vsub.f32 %v50, %v580
    %582 = vmatpush.msra.mxu0 %v581
    %v583 = vand.u32 %v49, 4294901760
    %v584 = vsub.f32 %v49, %v583
    %585 = vmatpush.msra.mxu0 %v584
    %v586 = vand.u32 %v48, 4294901760
    %v587 = vsub.f32 %v48, %v586
    %588 = vmatpush.msra.mxu0 %v587
    %v589 = vand.u32 %v47, 4294901760
    %v590 = vsub.f32 %v47, %v589
    %591 = vmatpush.msra.mxu0 %v590
    %v592 = vand.u32 %v46, 4294901760
    %v593 = vsub.f32 %v46, %v592
    %594 = vmatpush.msra.mxu0 %v593
    %v595 = vand.u32 %v45, 4294901760
    %v596 = vsub.f32 %v45, %v595
    %597 = vmatpush.msra.mxu0 %v596
    %v598 = vand.u32 %v44, 4294901760
    %v599 = vsub.f32 %v44, %v598
    %600 = vmatpush.msra.mxu0 %v599
    %v601 = vand.u32 %v43, 4294901760
    %v602 = vsub.f32 %v43, %v601
    %603 = vmatpush.msra.mxu0 %v602
    %v604 = vand.u32 %v413, 4294901760
    %v605 = vsub.f32 %v413, %v604
    %606 = vmatmul.f32.gmra.mxu0 %v605
    %v607 = vpop.f32.mrf.mxu0
    %v608 = vadd.f32 %v554, %v607
    %609 = vdwg.mxu0
    %v610 = vand.u32 %v58, 4294901760
    %611 = vmatpush.msra.mxu0 %v610
    %v612 = vand.u32 %v57, 4294901760
    %613 = vmatpush.msra.mxu0 %v612
    %v614 = vand.u32 %v56, 4294901760
    %615 = vmatpush.msra.mxu0 %v614
    %v616 = vand.u32 %v55, 4294901760
    %617 = vmatpush.msra.mxu0 %v616
    %v618 = vand.u32 %v54, 4294901760
    %619 = vmatpush.msra.mxu0 %v618
    %v620 = vand.u32 %v53, 4294901760
    %621 = vmatpush.msra.mxu0 %v620
    %v622 = vand.u32 %v52, 4294901760
    %623 = vmatpush.msra.mxu0 %v622
    %v624 = vand.u32 %v51, 4294901760
    %625 = vmatpush.msra.mxu0 %v624
    %v626 = vand.u32 %v50, 4294901760
    %627 = vmatpush.msra.mxu0 %v626
    %v628 = vand.u32 %v49, 4294901760
    %629 = vmatpush.msra.mxu0 %v628
    %v630 = vand.u32 %v48, 4294901760
    %631 = vmatpush.msra.mxu0 %v630
    %v632 = vand.u32 %v47, 4294901760
    %633 = vmatpush.msra.mxu0 %v632
    %v634 = vand.u32 %v46, 4294901760
    %635 = vmatpush.msra.mxu0 %v634
    %v636 = vand.u32 %v45, 4294901760
    %637 = vmatpush.msra.mxu0 %v636
    %v638 = vand.u32 %v44, 4294901760
    %639 = vmatpush.msra.mxu0 %v638
    %v640 = vand.u32 %v43, 4294901760
    %641 = vmatpush.msra.mxu0 %v640
    %v642 = vand.u32 %v413, 4294901760
    %v643 = vsub.f32 %v413, %v642
    %v644 = vand.u32 %v643, 4294901760
    %645 = vmatmul.f32.gmra.mxu0 %v644
    %v646 = vpop.f32.mrf.mxu0
    %v647 = vadd.f32 %v608, %v646
    %648 = vdwg.mxu0
    %v649 = vand.u32 %v58, 4294901760
    %v650 = vsub.f32 %v58, %v649
    %v651 = vand.u32 %v650, 4294901760
    %652 = vmatpush.msra.mxu0 %v651
    %v653 = vand.u32 %v57, 4294901760
    %v654 = vsub.f32 %v57, %v653
    %v655 = vand.u32 %v654, 4294901760
    %656 = vmatpush.msra.mxu0 %v655
    %v657 = vand.u32 %v56, 4294901760
    %v658 = vsub.f32 %v56, %v657
    %v659 = vand.u32 %v658, 4294901760
    %660 = vmatpush.msra.mxu0 %v659
    %v661 = vand.u32 %v55, 4294901760
    %v662 = vsub.f32 %v55, %v661
    %v663 = vand.u32 %v662, 4294901760
    %664 = vmatpush.msra.mxu0 %v663
    %v665 = vand.u32 %v54, 4294901760
    %v666 = vsub.f32 %v54, %v665
    %v667 = vand.u32 %v666, 4294901760
    %668 = vmatpush.msra.mxu0 %v667
    %v669 = vand.u32 %v53, 4294901760
    %v670 = vsub.f32 %v53, %v669
    %v671 = vand.u32 %v670, 4294901760
    %672 = vmatpush.msra.mxu0 %v671
    %v673 = vand.u32 %v52, 4294901760
    %v674 = vsub.f32 %v52, %v673
    %v675 = vand.u32 %v674, 4294901760
    %676 = vmatpush.msra.mxu0 %v675
    %v677 = vand.u32 %v51, 4294901760
    %v678 = vsub.f32 %v51, %v677
    %v679 = vand.u32 %v678, 4294901760
    %680 = vmatpush.msra.mxu0 %v679
    %v681 = vand.u32 %v50, 4294901760
    %v682 = vsub.f32 %v50, %v681
    %v683 = vand.u32 %v682, 4294901760
    %684 = vmatpush.msra.mxu0 %v683
    %v685 = vand.u32 %v49, 4294901760
    %v686 = vsub.f32 %v49, %v685
    %v687 = vand.u32 %v686, 4294901760
    %688 = vmatpush.msra.mxu0 %v687
    %v689 = vand.u32 %v48, 4294901760
    %v690 = vsub.f32 %v48, %v689
    %v691 = vand.u32 %v690, 4294901760
    %692 = vmatpush.msra.mxu0 %v691
    %v693 = vand.u32 %v47, 4294901760
    %v694 = vsub.f32 %v47, %v693
    %v695 = vand.u32 %v694, 4294901760
    %696 = vmatpush.msra.mxu0 %v695
    %v697 = vand.u32 %v46, 4294901760
    %v698 = vsub.f32 %v46, %v697
    %v699 = vand.u32 %v698, 4294901760
    %700 = vmatpush.msra.mxu0 %v699
    %v701 = vand.u32 %v45, 4294901760
    %v702 = vsub.f32 %v45, %v701
    %v703 = vand.u32 %v702, 4294901760
    %704 = vmatpush.msra.mxu0 %v703
    %v705 = vand.u32 %v44, 4294901760
    %v706 = vsub.f32 %v44, %v705
    %v707 = vand.u32 %v706, 4294901760
    %708 = vmatpush.msra.mxu0 %v707
    %v709 = vand.u32 %v43, 4294901760
    %v710 = vsub.f32 %v43, %v709
    %v711 = vand.u32 %v710, 4294901760
    %712 = vmatpush.msra.mxu0 %v711
    %v713 = vand.u32 %v413, 4294901760
    %714 = vmatmul.f32.gmra.mxu0 %v713
    %v715 = vpop.f32.mrf.mxu0
    %v716 = vadd.f32 %v647, %v715
    %717 = vdwg.mxu0
    %v718 = vand.u32 %v58, 4294901760
    %719 = vmatpush.msra.mxu0 %v718
    %v720 = vand.u32 %v57, 4294901760
    %721 = vmatpush.msra.mxu0 %v720
    %v722 = vand.u32 %v56, 4294901760
    %723 = vmatpush.msra.mxu0 %v722
    %v724 = vand.u32 %v55, 4294901760
    %725 = vmatpush.msra.mxu0 %v724
    %v726 = vand.u32 %v54, 4294901760
    %727 = vmatpush.msra.mxu0 %v726
    %v728 = vand.u32 %v53, 4294901760
    %729 = vmatpush.msra.mxu0 %v728
    %v730 = vand.u32 %v52, 4294901760
    %731 = vmatpush.msra.mxu0 %v730
    %v732 = vand.u32 %v51, 4294901760
    %733 = vmatpush.msra.mxu0 %v732
    %v734 = vand.u32 %v50, 4294901760
    %735 = vmatpush.msra.mxu0 %v734
    %v736 = vand.u32 %v49, 4294901760
    %737 = vmatpush.msra.mxu0 %v736
    %v738 = vand.u32 %v48, 4294901760
    %739 = vmatpush.msra.mxu0 %v738
    %v740 = vand.u32 %v47, 4294901760
    %741 = vmatpush.msra.mxu0 %v740
    %v742 = vand.u32 %v46, 4294901760
    %743 = vmatpush.msra.mxu0 %v742
    %v744 = vand.u32 %v45, 4294901760
    %745 = vmatpush.msra.mxu0 %v744
    %v746 = vand.u32 %v44, 4294901760
    %747 = vmatpush.msra.mxu0 %v746
    %v748 = vand.u32 %v43, 4294901760
    %749 = vmatpush.msra.mxu0 %v748
    %v750 = vand.u32 %v413, 4294901760
    %751 = vmatmul.f32.gmra.mxu0 %v750
    %v752 = vpop.f32.mrf.mxu0
    %v753 = vadd.f32 %v716, %v752
    %754 = vdwg.mxu0
    %v755 = vmax.f32 %v406, %v753
    %756 = vset.pattern.permute.xlu0 2
    %757 = vperm.xlu0 %756, %v42
    %v758 = vpop.permute.xlu0 %757
    %vm759 = vcmp.eq.s32.totalorder %v758, %v60
    %v760 = vsel %vm759, 1, 0
    %v761 = vcvt.s32.f32 %v760
    %v762 = vand.u32 %v58, 4294901760
    %763 = vmatpush.msra.mxu0 %v762
    %v764 = vand.u32 %v57, 4294901760
    %765 = vmatpush.msra.mxu0 %v764
    %v766 = vand.u32 %v56, 4294901760
    %767 = vmatpush.msra.mxu0 %v766
    %v768 = vand.u32 %v55, 4294901760
    %769 = vmatpush.msra.mxu0 %v768
    %v770 = vand.u32 %v54, 4294901760
    %771 = vmatpush.msra.mxu0 %v770
    %v772 = vand.u32 %v53, 4294901760
    %773 = vmatpush.msra.mxu0 %v772
    %v774 = vand.u32 %v52, 4294901760
    %775 = vmatpush.msra.mxu0 %v774
    %v776 = vand.u32 %v51, 4294901760
    %777 = vmatpush.msra.mxu0 %v776
    %v778 = vand.u32 %v50, 4294901760
    %779 = vmatpush.msra.mxu0 %v778
    %v780 = vand.u32 %v49, 4294901760
    %781 = vmatpush.msra.mxu0 %v780
    %v782 = vand.u32 %v48, 4294901760
    %783 = vmatpush.msra.mxu0 %v782
    %v784 = vand.u32 %v47, 4294901760
    %785 = vmatpush.msra.mxu0 %v784
    %v786 = vand.u32 %v46, 4294901760
    %787 = vmatpush.msra.mxu0 %v786
    %v788 = vand.u32 %v45, 4294901760
    %789 = vmatpush.msra.mxu0 %v788
    %v790 = vand.u32 %v44, 4294901760
    %791 = vmatpush.msra.mxu0 %v790
    %v792 = vand.u32 %v43, 4294901760
    %793 = vmatpush.msra.mxu0 %v792
    %v794 = vand.u32 %v761, 4294901760
    %v795 = vsub.f32 %v761, %v794
    %v796 = vand.u32 %v795, 4294901760
    %v797 = vsub.f32 %v795, %v796
    %v798 = vand.u32 %v797, 4294901760
    %799 = vmatmul.f32.gmra.mxu0 %v798
    %v800 = vpop.f32.mrf.mxu0
    %v801 = vadd.f32 0.0, %v800
    %802 = vdwg.mxu0
    %v803 = vand.u32 %v58, 4294901760
    %v804 = vsub.f32 %v58, %v803
    %v805 = vand.u32 %v804, 4294901760
    %v806 = vsub.f32 %v804, %v805
    %v807 = vand.u32 %v806, 4294901760
    %808 = vmatpush.msra.mxu0 %v807
    %v809 = vand.u32 %v57, 4294901760
    %v810 = vsub.f32 %v57, %v809
    %v811 = vand.u32 %v810, 4294901760
    %v812 = vsub.f32 %v810, %v811
    %v813 = vand.u32 %v812, 4294901760
    %814 = vmatpush.msra.mxu0 %v813
    %v815 = vand.u32 %v56, 4294901760
    %v816 = vsub.f32 %v56, %v815
    %v817 = vand.u32 %v816, 4294901760
    %v818 = vsub.f32 %v816, %v817
    %v819 = vand.u32 %v818, 4294901760
    %820 = vmatpush.msra.mxu0 %v819
    %v821 = vand.u32 %v55, 4294901760
    %v822 = vsub.f32 %v55, %v821
    %v823 = vand.u32 %v822, 4294901760
    %v824 = vsub.f32 %v822, %v823
    %v825 = vand.u32 %v824, 4294901760
    %826 = vmatpush.msra.mxu0 %v825
    %v827 = vand.u32 %v54, 4294901760
    %v828 = vsub.f32 %v54, %v827
    %v829 = vand.u32 %v828, 4294901760
    %v830 = vsub.f32 %v828, %v829
    %v831 = vand.u32 %v830, 4294901760
    %832 = vmatpush.msra.mxu0 %v831
    %v833 = vand.u32 %v53, 4294901760
    %v834 = vsub.f32 %v53, %v833
    %v835 = vand.u32 %v834, 4294901760
    %v836 = vsub.f32 %v834, %v835
    %v837 = vand.u32 %v836, 4294901760
    %838 = vmatpush.msra.mxu0 %v837
    %v839 = vand.u32 %v52, 4294901760
    %v840 = vsub.f32 %v52, %v839
    %v841 = vand.u32 %v840, 4294901760
    %v842 = vsub.f32 %v840, %v841
    %v843 = vand.u32 %v842, 4294901760
    %844 = vmatpush.msra.mxu0 %v843
    %v845 = vand.u32 %v51, 4294901760
    %v846 = vsub.f32 %v51, %v845
    %v847 = vand.u32 %v846, 4294901760
    %v848 = vsub.f32 %v846, %v847
    %v849 = vand.u32 %v848, 4294901760
    %850 = vmatpush.msra.mxu0 %v849
    %v851 = vand.u32 %v50, 4294901760
    %v852 = vsub.f32 %v50, %v851
    %v853 = vand.u32 %v852, 4294901760
    %v854 = vsub.f32 %v852, %v853
    %v855 = vand.u32 %v854, 4294901760
    %856 = vmatpush.msra.mxu0 %v855
    %v857 = vand.u32 %v49, 4294901760
    %v858 = vsub.f32 %v49, %v857
    %v859 = vand.u32 %v858, 4294901760
    %v860 = vsub.f32 %v858, %v859
    %v861 = vand.u32 %v860, 4294901760
    %862 = vmatpush.msra.mxu0 %v861
    %v863 = vand.u32 %v48, 4294901760
    %v864 = vsub.f32 %v48, %v863
    %v865 = vand.u32 %v864, 4294901760
    %v866 = vsub.f32 %v864, %v865
    %v867 = vand.u32 %v866, 4294901760
    %868 = vmatpush.msra.mxu0 %v867
    %v869 = vand.u32 %v47, 4294901760
    %v870 = vsub.f32 %v47, %v869
    %v871 = vand.u32 %v870, 4294901760
    %v872 = vsub.f32 %v870, %v871
    %v873 = vand.u32 %v872, 4294901760
    %874 = vmatpush.msra.mxu0 %v873
    %v875 = vand.u32 %v46, 4294901760
    %v876 = vsub.f32 %v46, %v875
    %v877 = vand.u32 %v876, 4294901760
    %v878 = vsub.f32 %v876, %v877
    %v879 = vand.u32 %v878, 4294901760
    %880 = vmatpush.msra.mxu0 %v879
    %v881 = vand.u32 %v45, 4294901760
    %v882 = vsub.f32 %v45, %v881
    %v883 = vand.u32 %v882, 4294901760
    %v884 = vsub.f32 %v882, %v883
    %v885 = vand.u32 %v884, 4294901760
    %886 = vmatpush.msra.mxu0 %v885
    %v887 = vand.u32 %v44, 4294901760
    %v888 = vsub.f32 %v44, %v887
    %v889 = vand.u32 %v888, 4294901760
    %v890 = vsub.f32 %v888, %v889
    %v891 = vand.u32 %v890, 4294901760
    %892 = vmatpush.msra.mxu0 %v891
    %v893 = vand.u32 %v43, 4294901760
    %v894 = vsub.f32 %v43, %v893
    %v895 = vand.u32 %v894, 4294901760
    %v896 = vsub.f32 %v894, %v895
    %v897 = vand.u32 %v896, 4294901760
    %898 = vmatpush.msra.mxu0 %v897
    %v899 = vand.u32 %v761, 4294901760
    %900 = vmatmul.f32.gmra.mxu0 %v899
    %v901 = vpop.f32.mrf.mxu0
    %v902 = vadd.f32 %v801, %v901
    %903 = vdwg.mxu0
    %v904 = vand.u32 %v58, 4294901760
    %v905 = vsub.f32 %v58, %v904
    %906 = vmatpush.msra.mxu0 %v905
    %v907 = vand.u32 %v57, 4294901760
    %v908 = vsub.f32 %v57, %v907
    %909 = vmatpush.msra.mxu0 %v908
    %v910 = vand.u32 %v56, 4294901760
    %v911 = vsub.f32 %v56, %v910
    %912 = vmatpush.msra.mxu0 %v911
    %v913 = vand.u32 %v55, 4294901760
    %v914 = vsub.f32 %v55, %v913
    %915 = vmatpush.msra.mxu0 %v914
    %v916 = vand.u32 %v54, 4294901760
    %v917 = vsub.f32 %v54, %v916
    %918 = vmatpush.msra.mxu0 %v917
    %v919 = vand.u32 %v53, 4294901760
    %v920 = vsub.f32 %v53, %v919
    %921 = vmatpush.msra.mxu0 %v920
    %v922 = vand.u32 %v52, 4294901760
    %v923 = vsub.f32 %v52, %v922
    %924 = vmatpush.msra.mxu0 %v923
    %v925 = vand.u32 %v51, 4294901760
    %v926 = vsub.f32 %v51, %v925
    %927 = vmatpush.msra.mxu0 %v926
    %v928 = vand.u32 %v50, 4294901760
    %v929 = vsub.f32 %v50, %v928
    %930 = vmatpush.msra.mxu0 %v929
    %v931 = vand.u32 %v49, 4294901760
    %v932 = vsub.f32 %v49, %v931
    %933 = vmatpush.msra.mxu0 %v932
    %v934 = vand.u32 %v48, 4294901760
    %v935 = vsub.f32 %v48, %v934
    %936 = vmatpush.msra.mxu0 %v935
    %v937 = vand.u32 %v47, 4294901760
    %v938 = vsub.f32 %v47, %v937
    %939 = vmatpush.msra.mxu0 %v938
    %v940 = vand.u32 %v46, 4294901760
    %v941 = vsub.f32 %v46, %v940
    %942 = vmatpush.msra.mxu0 %v941
    %v943 = vand.u32 %v45, 4294901760
    %v944 = vsub.f32 %v45, %v943
    %945 = vmatpush.msra.mxu0 %v944
    %v946 = vand.u32 %v44, 4294901760
    %v947 = vsub.f32 %v44, %v946
    %948 = vmatpush.msra.mxu0 %v947
    %v949 = vand.u32 %v43, 4294901760
    %v950 = vsub.f32 %v43, %v949
    %951 = vmatpush.msra.mxu0 %v950
    %v952 = vand.u32 %v761, 4294901760
    %v953 = vsub.f32 %v761, %v952
    %954 = vmatmul.f32.gmra.mxu0 %v953
    %v955 = vpop.f32.mrf.mxu0
    %v956 = vadd.f32 %v902, %v955
    %957 = vdwg.mxu0
    %v958 = vand.u32 %v58, 4294901760
    %959 = vmatpush.msra.mxu0 %v958
    %v960 = vand.u32 %v57, 4294901760
    %961 = vmatpush.msra.mxu0 %v960
    %v962 = vand.u32 %v56, 4294901760
    %963 = vmatpush.msra.mxu0 %v962
    %v964 = vand.u32 %v55, 4294901760
    %965 = vmatpush.msra.mxu0 %v964
    %v966 = vand.u32 %v54, 4294901760
    %967 = vmatpush.msra.mxu0 %v966
    %v968 = vand.u32 %v53, 4294901760
    %969 = vmatpush.msra.mxu0 %v968
    %v970 = vand.u32 %v52, 4294901760
    %971 = vmatpush.msra.mxu0 %v970
    %v972 = vand.u32 %v51, 4294901760
    %973 = vmatpush.msra.mxu0 %v972
    %v974 = vand.u32 %v50, 4294901760
    %975 = vmatpush.msra.mxu0 %v974
    %v976 = vand.u32 %v49, 4294901760
    %977 = vmatpush.msra.mxu0 %v976
    %v978 = vand.u32 %v48, 4294901760
    %979 = vmatpush.msra.mxu0 %v978
    %v980 = vand.u32 %v47, 4294901760
    %981 = vmatpush.msra.mxu0 %v980
    %v982 = vand.u32 %v46, 4294901760
    %983 = vmatpush.msra.mxu0 %v982
    %v984 = vand.u32 %v45, 4294901760
    %985 = vmatpush.msra.mxu0 %v984
    %v986 = vand.u32 %v44, 4294901760
    %987 = vmatpush.msra.mxu0 %v986
    %v988 = vand.u32 %v43, 4294901760
    %989 = vmatpush.msra.mxu0 %v988
    %v990 = vand.u32 %v761, 4294901760
    %v991 = vsub.f32 %v761, %v990
    %v992 = vand.u32 %v991, 4294901760
    %993 = vmatmul.f32.gmra.mxu0 %v992
    %v994 = vpop.f32.mrf.mxu0
    %v995 = vadd.f32 %v956, %v994
    %996 = vdwg.mxu0
    %v997 = vand.u32 %v58, 4294901760
    %v998 = vsub.f32 %v58, %v997
    %v999 = vand.u32 %v998, 4294901760
    %1000 = vmatpush.msra.mxu0 %v999
    %v1001 = vand.u32 %v57, 4294901760
    %v1002 = vsub.f32 %v57, %v1001
    %v1003 = vand.u32 %v1002, 4294901760
    %1004 = vmatpush.msra.mxu0 %v1003
    %v1005 = vand.u32 %v56, 4294901760
    %v1006 = vsub.f32 %v56, %v1005
    %v1007 = vand.u32 %v1006, 4294901760
    %1008 = vmatpush.msra.mxu0 %v1007
    %v1009 = vand.u32 %v55, 4294901760
    %v1010 = vsub.f32 %v55, %v1009
    %v1011 = vand.u32 %v1010, 4294901760
    %1012 = vmatpush.msra.mxu0 %v1011
    %v1013 = vand.u32 %v54, 4294901760
    %v1014 = vsub.f32 %v54, %v1013
    %v1015 = vand.u32 %v1014, 4294901760
    %1016 = vmatpush.msra.mxu0 %v1015
    %v1017 = vand.u32 %v53, 4294901760
    %v1018 = vsub.f32 %v53, %v1017
    %v1019 = vand.u32 %v1018, 4294901760
    %1020 = vmatpush.msra.mxu0 %v1019
    %v1021 = vand.u32 %v52, 4294901760
    %v1022 = vsub.f32 %v52, %v1021
    %v1023 = vand.u32 %v1022, 4294901760
    %1024 = vmatpush.msra.mxu0 %v1023
    %v1025 = vand.u32 %v51, 4294901760
    %v1026 = vsub.f32 %v51, %v1025
    %v1027 = vand.u32 %v1026, 4294901760
    %1028 = vmatpush.msra.mxu0 %v1027
    %v1029 = vand.u32 %v50, 4294901760
    %v1030 = vsub.f32 %v50, %v1029
    %v1031 = vand.u32 %v1030, 4294901760
    %1032 = vmatpush.msra.mxu0 %v1031
    %v1033 = vand.u32 %v49, 4294901760
    %v1034 = vsub.f32 %v49, %v1033
    %v1035 = vand.u32 %v1034, 4294901760
    %1036 = vmatpush.msra.mxu0 %v1035
    %v1037 = vand.u32 %v48, 4294901760
    %v1038 = vsub.f32 %v48, %v1037
    %v1039 = vand.u32 %v1038, 4294901760
    %1040 = vmatpush.msra.mxu0 %v1039
    %v1041 = vand.u32 %v47, 4294901760
    %v1042 = vsub.f32 %v47, %v1041
    %v1043 = vand.u32 %v1042, 4294901760
    %1044 = vmatpush.msra.mxu0 %v1043
    %v1045 = vand.u32 %v46, 4294901760
    %v1046 = vsub.f32 %v46, %v1045
    %v1047 = vand.u32 %v1046, 4294901760
    %1048 = vmatpush.msra.mxu0 %v1047
    %v1049 = vand.u32 %v45, 4294901760
    %v1050 = vsub.f32 %v45, %v1049
    %v1051 = vand.u32 %v1050, 4294901760
    %1052 = vmatpush.msra.mxu0 %v1051
    %v1053 = vand.u32 %v44, 4294901760
    %v1054 = vsub.f32 %v44, %v1053
    %v1055 = vand.u32 %v1054, 4294901760
    %1056 = vmatpush.msra.mxu0 %v1055
    %v1057 = vand.u32 %v43, 4294901760
    %v1058 = vsub.f32 %v43, %v1057
    %v1059 = vand.u32 %v1058, 4294901760
    %1060 = vmatpush.msra.mxu0 %v1059
    %v1061 = vand.u32 %v761, 4294901760
    %1062 = vmatmul.f32.gmra.mxu0 %v1061
    %v1063 = vpop.f32.mrf.mxu0
    %v1064 = vadd.f32 %v995, %v1063
    %1065 = vdwg.mxu0
    %v1066 = vand.u32 %v58, 4294901760
    %1067 = vmatpush.msra.mxu0 %v1066
    %v1068 = vand.u32 %v57, 4294901760
    %1069 = vmatpush.msra.mxu0 %v1068
    %v1070 = vand.u32 %v56, 4294901760
    %1071 = vmatpush.msra.mxu0 %v1070
    %v1072 = vand.u32 %v55, 4294901760
    %1073 = vmatpush.msra.mxu0 %v1072
    %v1074 = vand.u32 %v54, 4294901760
    %1075 = vmatpush.msra.mxu0 %v1074
    %v1076 = vand.u32 %v53, 4294901760
    %1077 = vmatpush.msra.mxu0 %v1076
    %v1078 = vand.u32 %v52, 4294901760
    %1079 = vmatpush.msra.mxu0 %v1078
    %v1080 = vand.u32 %v51, 4294901760
    %1081 = vmatpush.msra.mxu0 %v1080
    %v1082 = vand.u32 %v50, 4294901760
    %1083 = vmatpush.msra.mxu0 %v1082
    %v1084 = vand.u32 %v49, 4294901760
    %1085 = vmatpush.msra.mxu0 %v1084
    %v1086 = vand.u32 %v48, 4294901760
    %1087 = vmatpush.msra.mxu0 %v1086
    %v1088 = vand.u32 %v47, 4294901760
    %1089 = vmatpush.msra.mxu0 %v1088
    %v1090 = vand.u32 %v46, 4294901760
    %1091 = vmatpush.msra.mxu0 %v1090
    %v1092 = vand.u32 %v45, 4294901760
    %1093 = vmatpush.msra.mxu0 %v1092
    %v1094 = vand.u32 %v44, 4294901760
    %1095 = vmatpush.msra.mxu0 %v1094
    %v1096 = vand.u32 %v43, 4294901760
    %1097 = vmatpush.msra.mxu0 %v1096
    %v1098 = vand.u32 %v761, 4294901760
    %1099 = vmatmul.f32.gmra.mxu0 %v1098
    %v1100 = vpop.f32.mrf.mxu0
    %v1101 = vadd.f32 %v1064, %v1100
    %1102 = vdwg.mxu0
    %v1103 = vmax.f32 %v755, %v1101
    %1104 = vset.pattern.permute.xlu0 3
    %1105 = vperm.xlu0 %1104, %v42
    %v1106 = vpop.permute.xlu0 %1105
    %vm1107 = vcmp.eq.s32.totalorder %v1106, %v60
    %v1108 = vsel %vm1107, 1, 0
    %v1109 = vcvt.s32.f32 %v1108
    %v1110 = vand.u32 %v58, 4294901760
    %1111 = vmatpush.msra.mxu0 %v1110
    %v1112 = vand.u32 %v57, 4294901760
    %1113 = vmatpush.msra.mxu0 %v1112
    %v1114 = vand.u32 %v56, 4294901760
    %1115 = vmatpush.msra.mxu0 %v1114
    %v1116 = vand.u32 %v55, 4294901760
    %1117 = vmatpush.msra.mxu0 %v1116
    %v1118 = vand.u32 %v54, 4294901760
    %1119 = vmatpush.msra.mxu0 %v1118
    %v1120 = vand.u32 %v53, 4294901760
    %1121 = vmatpush.msra.mxu0 %v1120
    %v1122 = vand.u32 %v52, 4294901760
    %1123 = vmatpush.msra.mxu0 %v1122
    %v1124 = vand.u32 %v51, 4294901760
    %1125 = vmatpush.msra.mxu0 %v1124
    %v1126 = vand.u32 %v50, 4294901760
    %1127 = vmatpush.msra.mxu0 %v1126
    %v1128 = vand.u32 %v49, 4294901760
    %1129 = vmatpush.msra.mxu0 %v1128
    %v1130 = vand.u32 %v48, 4294901760
    %1131 = vmatpush.msra.mxu0 %v1130
    %v1132 = vand.u32 %v47, 4294901760
    %1133 = vmatpush.msra.mxu0 %v1132
    %v1134 = vand.u32 %v46, 4294901760
    %1135 = vmatpush.msra.mxu0 %v1134
    %v1136 = vand.u32 %v45, 4294901760
    %1137 = vmatpush.msra.mxu0 %v1136
    %v1138 = vand.u32 %v44, 4294901760
    %1139 = vmatpush.msra.mxu0 %v1138
    %v1140 = vand.u32 %v43, 4294901760
    %1141 = vmatpush.msra.mxu0 %v1140
    %v1142 = vand.u32 %v1109, 4294901760
    %v1143 = vsub.f32 %v1109, %v1142
    %v1144 = vand.u32 %v1143, 4294901760
    %v1145 = vsub.f32 %v1143, %v1144
    %v1146 = vand.u32 %v1145, 4294901760
    %1147 = vmatmul.f32.gmra.mxu0 %v1146
    %v1148 = vpop.f32.mrf.mxu0
    %v1149 = vadd.f32 0.0, %v1148
    %1150 = vdwg.mxu0
    %v1151 = vand.u32 %v58, 4294901760
    %v1152 = vsub.f32 %v58, %v1151
    %v1153 = vand.u32 %v1152, 4294901760
    %v1154 = vsub.f32 %v1152, %v1153
    %v1155 = vand.u32 %v1154, 4294901760
    %1156 = vmatpush.msra.mxu0 %v1155
    %v1157 = vand.u32 %v57, 4294901760
    %v1158 = vsub.f32 %v57, %v1157
    %v1159 = vand.u32 %v1158, 4294901760
    %v1160 = vsub.f32 %v1158, %v1159
    %v1161 = vand.u32 %v1160, 4294901760
    %1162 = vmatpush.msra.mxu0 %v1161
    %v1163 = vand.u32 %v56, 4294901760
    %v1164 = vsub.f32 %v56, %v1163
    %v1165 = vand.u32 %v1164, 4294901760
    %v1166 = vsub.f32 %v1164, %v1165
    %v1167 = vand.u32 %v1166, 4294901760
    %1168 = vmatpush.msra.mxu0 %v1167
    %v1169 = vand.u32 %v55, 4294901760
    %v1170 = vsub.f32 %v55, %v1169
    %v1171 = vand.u32 %v1170, 4294901760
    %v1172 = vsub.f32 %v1170, %v1171
    %v1173 = vand.u32 %v1172, 4294901760
    %1174 = vmatpush.msra.mxu0 %v1173
    %v1175 = vand.u32 %v54, 4294901760
    %v1176 = vsub.f32 %v54, %v1175
    %v1177 = vand.u32 %v1176, 4294901760
    %v1178 = vsub.f32 %v1176, %v1177
    %v1179 = vand.u32 %v1178, 4294901760
    %1180 = vmatpush.msra.mxu0 %v1179
    %v1181 = vand.u32 %v53, 4294901760
    %v1182 = vsub.f32 %v53, %v1181
    %v1183 = vand.u32 %v1182, 4294901760
    %v1184 = vsub.f32 %v1182, %v1183
    %v1185 = vand.u32 %v1184, 4294901760
    %1186 = vmatpush.msra.mxu0 %v1185
    %v1187 = vand.u32 %v52, 4294901760
    %v1188 = vsub.f32 %v52, %v1187
    %v1189 = vand.u32 %v1188, 4294901760
    %v1190 = vsub.f32 %v1188, %v1189
    %v1191 = vand.u32 %v1190, 4294901760
    %1192 = vmatpush.msra.mxu0 %v1191
    %v1193 = vand.u32 %v51, 4294901760
    %v1194 = vsub.f32 %v51, %v1193
    %v1195 = vand.u32 %v1194, 4294901760
    %v1196 = vsub.f32 %v1194, %v1195
    %v1197 = vand.u32 %v1196, 4294901760
    %1198 = vmatpush.msra.mxu0 %v1197
    %v1199 = vand.u32 %v50, 4294901760
    %v1200 = vsub.f32 %v50, %v1199
    %v1201 = vand.u32 %v1200, 4294901760
    %v1202 = vsub.f32 %v1200, %v1201
    %v1203 = vand.u32 %v1202, 4294901760
    %1204 = vmatpush.msra.mxu0 %v1203
    %v1205 = vand.u32 %v49, 4294901760
    %v1206 = vsub.f32 %v49, %v1205
    %v1207 = vand.u32 %v1206, 4294901760
    %v1208 = vsub.f32 %v1206, %v1207
    %v1209 = vand.u32 %v1208, 4294901760
    %1210 = vmatpush.msra.mxu0 %v1209
    %v1211 = vand.u32 %v48, 4294901760
    %v1212 = vsub.f32 %v48, %v1211
    %v1213 = vand.u32 %v1212, 4294901760
    %v1214 = vsub.f32 %v1212, %v1213
    %v1215 = vand.u32 %v1214, 4294901760
    %1216 = vmatpush.msra.mxu0 %v1215
    %v1217 = vand.u32 %v47, 4294901760
    %v1218 = vsub.f32 %v47, %v1217
    %v1219 = vand.u32 %v1218, 4294901760
    %v1220 = vsub.f32 %v1218, %v1219
    %v1221 = vand.u32 %v1220, 4294901760
    %1222 = vmatpush.msra.mxu0 %v1221
    %v1223 = vand.u32 %v46, 4294901760
    %v1224 = vsub.f32 %v46, %v1223
    %v1225 = vand.u32 %v1224, 4294901760
    %v1226 = vsub.f32 %v1224, %v1225
    %v1227 = vand.u32 %v1226, 4294901760
    %1228 = vmatpush.msra.mxu0 %v1227
    %v1229 = vand.u32 %v45, 4294901760
    %v1230 = vsub.f32 %v45, %v1229
    %v1231 = vand.u32 %v1230, 4294901760
    %v1232 = vsub.f32 %v1230, %v1231
    %v1233 = vand.u32 %v1232, 4294901760
    %1234 = vmatpush.msra.mxu0 %v1233
    %v1235 = vand.u32 %v44, 4294901760
    %v1236 = vsub.f32 %v44, %v1235
    %v1237 = vand.u32 %v1236, 4294901760
    %v1238 = vsub.f32 %v1236, %v1237
    %v1239 = vand.u32 %v1238, 4294901760
    %1240 = vmatpush.msra.mxu0 %v1239
    %v1241 = vand.u32 %v43, 4294901760
    %v1242 = vsub.f32 %v43, %v1241
    %v1243 = vand.u32 %v1242, 4294901760
    %v1244 = vsub.f32 %v1242, %v1243
    %v1245 = vand.u32 %v1244, 4294901760
    %1246 = vmatpush.msra.mxu0 %v1245
    %v1247 = vand.u32 %v1109, 4294901760
    %1248 = vmatmul.f32.gmra.mxu0 %v1247
    %v1249 = vpop.f32.mrf.mxu0
    %v1250 = vadd.f32 %v1149, %v1249
    %1251 = vdwg.mxu0
    %v1252 = vand.u32 %v58, 4294901760
    %v1253 = vsub.f32 %v58, %v1252
    %1254 = vmatpush.msra.mxu0 %v1253
    %v1255 = vand.u32 %v57, 4294901760
    %v1256 = vsub.f32 %v57, %v1255
    %1257 = vmatpush.msra.mxu0 %v1256
    %v1258 = vand.u32 %v56, 4294901760
    %v1259 = vsub.f32 %v56, %v1258
    %1260 = vmatpush.msra.mxu0 %v1259
    %v1261 = vand.u32 %v55, 4294901760
    %v1262 = vsub.f32 %v55, %v1261
    %1263 = vmatpush.msra.mxu0 %v1262
    %v1264 = vand.u32 %v54, 4294901760
    %v1265 = vsub.f32 %v54, %v1264
    %1266 = vmatpush.msra.mxu0 %v1265
    %v1267 = vand.u32 %v53, 4294901760
    %v1268 = vsub.f32 %v53, %v1267
    %1269 = vmatpush.msra.mxu0 %v1268
    %v1270 = vand.u32 %v52, 4294901760
    %v1271 = vsub.f32 %v52, %v1270
    %1272 = vmatpush.msra.mxu0 %v1271
    %v1273 = vand.u32 %v51, 4294901760
    %v1274 = vsub.f32 %v51, %v1273
    %1275 = vmatpush.msra.mxu0 %v1274
    %v1276 = vand.u32 %v50, 4294901760
    %v1277 = vsub.f32 %v50, %v1276
    %1278 = vmatpush.msra.mxu0 %v1277
    %v1279 = vand.u32 %v49, 4294901760
    %v1280 = vsub.f32 %v49, %v1279
    %1281 = vmatpush.msra.mxu0 %v1280
    %v1282 = vand.u32 %v48, 4294901760
    %v1283 = vsub.f32 %v48, %v1282
    %1284 = vmatpush.msra.mxu0 %v1283
    %v1285 = vand.u32 %v47, 4294901760
    %v1286 = vsub.f32 %v47, %v1285
    %1287 = vmatpush.msra.mxu0 %v1286
    %v1288 = vand.u32 %v46, 4294901760
    %v1289 = vsub.f32 %v46, %v1288
    %1290 = vmatpush.msra.mxu0 %v1289
    %v1291 = vand.u32 %v45, 4294901760
    %v1292 = vsub.f32 %v45, %v1291
    %1293 = vmatpush.msra.mxu0 %v1292
    %v1294 = vand.u32 %v44, 4294901760
    %v1295 = vsub.f32 %v44, %v1294
    %1296 = vmatpush.msra.mxu0 %v1295
    %v1297 = vand.u32 %v43, 4294901760
    %v1298 = vsub.f32 %v43, %v1297
    %1299 = vmatpush.msra.mxu0 %v1298
    %v1300 = vand.u32 %v1109, 4294901760
    %v1301 = vsub.f32 %v1109, %v1300
    %1302 = vmatmul.f32.gmra.mxu0 %v1301
    %v1303 = vpop.f32.mrf.mxu0
    %v1304 = vadd.f32 %v1250, %v1303
    %1305 = vdwg.mxu0
    %v1306 = vand.u32 %v58, 4294901760
    %1307 = vmatpush.msra.mxu0 %v1306
    %v1308 = vand.u32 %v57, 4294901760
    %1309 = vmatpush.msra.mxu0 %v1308
    %v1310 = vand.u32 %v56, 4294901760
    %1311 = vmatpush.msra.mxu0 %v1310
    %v1312 = vand.u32 %v55, 4294901760
    %1313 = vmatpush.msra.mxu0 %v1312
    %v1314 = vand.u32 %v54, 4294901760
    %1315 = vmatpush.msra.mxu0 %v1314
    %v1316 = vand.u32 %v53, 4294901760
    %1317 = vmatpush.msra.mxu0 %v1316
    %v1318 = vand.u32 %v52, 4294901760
    %1319 = vmatpush.msra.mxu0 %v1318
    %v1320 = vand.u32 %v51, 4294901760
    %1321 = vmatpush.msra.mxu0 %v1320
    %v1322 = vand.u32 %v50, 4294901760
    %1323 = vmatpush.msra.mxu0 %v1322
    %v1324 = vand.u32 %v49, 4294901760
    %1325 = vmatpush.msra.mxu0 %v1324
    %v1326 = vand.u32 %v48, 4294901760
    %1327 = vmatpush.msra.mxu0 %v1326
    %v1328 = vand.u32 %v47, 4294901760
    %1329 = vmatpush.msra.mxu0 %v1328
    %v1330 = vand.u32 %v46, 4294901760
    %1331 = vmatpush.msra.mxu0 %v1330
    %v1332 = vand.u32 %v45, 4294901760
    %1333 = vmatpush.msra.mxu0 %v1332
    %v1334 = vand.u32 %v44, 4294901760
    %1335 = vmatpush.msra.mxu0 %v1334
    %v1336 = vand.u32 %v43, 4294901760
    %1337 = vmatpush.msra.mxu0 %v1336
    %v1338 = vand.u32 %v1109, 4294901760
    %v1339 = vsub.f32 %v1109, %v1338
    %v1340 = vand.u32 %v1339, 4294901760
    %1341 = vmatmul.f32.gmra.mxu0 %v1340
    %v1342 = vpop.f32.mrf.mxu0
    %v1343 = vadd.f32 %v1304, %v1342
    %1344 = vdwg.mxu0
    %v1345 = vand.u32 %v58, 4294901760
    %v1346 = vsub.f32 %v58, %v1345
    %v1347 = vand.u32 %v1346, 4294901760
    %1348 = vmatpush.msra.mxu0 %v1347
    %v1349 = vand.u32 %v57, 4294901760
    %v1350 = vsub.f32 %v57, %v1349
    %v1351 = vand.u32 %v1350, 4294901760
    %1352 = vmatpush.msra.mxu0 %v1351
    %v1353 = vand.u32 %v56, 4294901760
    %v1354 = vsub.f32 %v56, %v1353
    %v1355 = vand.u32 %v1354, 4294901760
    %1356 = vmatpush.msra.mxu0 %v1355
    %v1357 = vand.u32 %v55, 4294901760
    %v1358 = vsub.f32 %v55, %v1357
    %v1359 = vand.u32 %v1358, 4294901760
    %1360 = vmatpush.msra.mxu0 %v1359
    %v1361 = vand.u32 %v54, 4294901760
    %v1362 = vsub.f32 %v54, %v1361
    %v1363 = vand.u32 %v1362, 4294901760
    %1364 = vmatpush.msra.mxu0 %v1363
    %v1365 = vand.u32 %v53, 4294901760
    %v1366 = vsub.f32 %v53, %v1365
    %v1367 = vand.u32 %v1366, 4294901760
    %1368 = vmatpush.msra.mxu0 %v1367
    %v1369 = vand.u32 %v52, 4294901760
    %v1370 = vsub.f32 %v52, %v1369
    %v1371 = vand.u32 %v1370, 4294901760
    %1372 = vmatpush.msra.mxu0 %v1371
    %v1373 = vand.u32 %v51, 4294901760
    %v1374 = vsub.f32 %v51, %v1373
    %v1375 = vand.u32 %v1374, 4294901760
    %1376 = vmatpush.msra.mxu0 %v1375
    %v1377 = vand.u32 %v50, 4294901760
    %v1378 = vsub.f32 %v50, %v1377
    %v1379 = vand.u32 %v1378, 4294901760
    %1380 = vmatpush.msra.mxu0 %v1379
    %v1381 = vand.u32 %v49, 4294901760
    %v1382 = vsub.f32 %v49, %v1381
    %v1383 = vand.u32 %v1382, 4294901760
    %1384 = vmatpush.msra.mxu0 %v1383
    %v1385 = vand.u32 %v48, 4294901760
    %v1386 = vsub.f32 %v48, %v1385
    %v1387 = vand.u32 %v1386, 4294901760
    %1388 = vmatpush.msra.mxu0 %v1387
    %v1389 = vand.u32 %v47, 4294901760
    %v1390 = vsub.f32 %v47, %v1389
    %v1391 = vand.u32 %v1390, 4294901760
    %1392 = vmatpush.msra.mxu0 %v1391
    %v1393 = vand.u32 %v46, 4294901760
    %v1394 = vsub.f32 %v46, %v1393
    %v1395 = vand.u32 %v1394, 4294901760
    %1396 = vmatpush.msra.mxu0 %v1395
    %v1397 = vand.u32 %v45, 4294901760
    %v1398 = vsub.f32 %v45, %v1397
    %v1399 = vand.u32 %v1398, 4294901760
    %1400 = vmatpush.msra.mxu0 %v1399
    %v1401 = vand.u32 %v44, 4294901760
    %v1402 = vsub.f32 %v44, %v1401
    %v1403 = vand.u32 %v1402, 4294901760
    %1404 = vmatpush.msra.mxu0 %v1403
    %v1405 = vand.u32 %v43, 4294901760
    %v1406 = vsub.f32 %v43, %v1405
    %v1407 = vand.u32 %v1406, 4294901760
    %1408 = vmatpush.msra.mxu0 %v1407
    %v1409 = vand.u32 %v1109, 4294901760
    %1410 = vmatmul.f32.gmra.mxu0 %v1409
    %v1411 = vpop.f32.mrf.mxu0
    %v1412 = vadd.f32 %v1343, %v1411
    %1413 = vdwg.mxu0
    %v1414 = vand.u32 %v58, 4294901760
    %1415 = vmatpush.msra.mxu0 %v1414
    %v1416 = vand.u32 %v57, 4294901760
    %1417 = vmatpush.msra.mxu0 %v1416
    %v1418 = vand.u32 %v56, 4294901760
    %1419 = vmatpush.msra.mxu0 %v1418
    %v1420 = vand.u32 %v55, 4294901760
    %1421 = vmatpush.msra.mxu0 %v1420
    %v1422 = vand.u32 %v54, 4294901760
    %1423 = vmatpush.msra.mxu0 %v1422
    %v1424 = vand.u32 %v53, 4294901760
    %1425 = vmatpush.msra.mxu0 %v1424
    %v1426 = vand.u32 %v52, 4294901760
    %1427 = vmatpush.msra.mxu0 %v1426
    %v1428 = vand.u32 %v51, 4294901760
    %1429 = vmatpush.msra.mxu0 %v1428
    %v1430 = vand.u32 %v50, 4294901760
    %1431 = vmatpush.msra.mxu0 %v1430
    %v1432 = vand.u32 %v49, 4294901760
    %1433 = vmatpush.msra.mxu0 %v1432
    %v1434 = vand.u32 %v48, 4294901760
    %1435 = vmatpush.msra.mxu0 %v1434
    %v1436 = vand.u32 %v47, 4294901760
    %1437 = vmatpush.msra.mxu0 %v1436
    %v1438 = vand.u32 %v46, 4294901760
    %1439 = vmatpush.msra.mxu0 %v1438
    %v1440 = vand.u32 %v45, 4294901760
    %1441 = vmatpush.msra.mxu0 %v1440
    %v1442 = vand.u32 %v44, 4294901760
    %1443 = vmatpush.msra.mxu0 %v1442
    %v1444 = vand.u32 %v43, 4294901760
    %1445 = vmatpush.msra.mxu0 %v1444
    %v1446 = vand.u32 %v1109, 4294901760
    %1447 = vmatmul.f32.gmra.mxu0 %v1446
    %v1448 = vpop.f32.mrf.mxu0
    %v1449 = vadd.f32 %v1412, %v1448
    %1450 = vdwg.mxu0
    %v1451 = vmax.f32 %v1103, %v1449
    %1452 = vset.pattern.permute.xlu0 4
    %1453 = vperm.xlu0 %1452, %v42
    %v1454 = vpop.permute.xlu0 %1453
    %vm1455 = vcmp.eq.s32.totalorder %v1454, %v60
    %v1456 = vsel %vm1455, 1, 0
    %v1457 = vcvt.s32.f32 %v1456
    %v1458 = vand.u32 %v58, 4294901760
    %1459 = vmatpush.msra.mxu0 %v1458
    %v1460 = vand.u32 %v57, 4294901760
    %1461 = vmatpush.msra.mxu0 %v1460
    %v1462 = vand.u32 %v56, 4294901760
    %1463 = vmatpush.msra.mxu0 %v1462
    %v1464 = vand.u32 %v55, 4294901760
    %1465 = vmatpush.msra.mxu0 %v1464
    %v1466 = vand.u32 %v54, 4294901760
    %1467 = vmatpush.msra.mxu0 %v1466
    %v1468 = vand.u32 %v53, 4294901760
    %1469 = vmatpush.msra.mxu0 %v1468
    %v1470 = vand.u32 %v52, 4294901760
    %1471 = vmatpush.msra.mxu0 %v1470
    %v1472 = vand.u32 %v51, 4294901760
    %1473 = vmatpush.msra.mxu0 %v1472
    %v1474 = vand.u32 %v50, 4294901760
    %1475 = vmatpush.msra.mxu0 %v1474
    %v1476 = vand.u32 %v49, 4294901760
    %1477 = vmatpush.msra.mxu0 %v1476
    %v1478 = vand.u32 %v48, 4294901760
    %1479 = vmatpush.msra.mxu0 %v1478
    %v1480 = vand.u32 %v47, 4294901760
    %1481 = vmatpush.msra.mxu0 %v1480
    %v1482 = vand.u32 %v46, 4294901760
    %1483 = vmatpush.msra.mxu0 %v1482
    %v1484 = vand.u32 %v45, 4294901760
    %1485 = vmatpush.msra.mxu0 %v1484
    %v1486 = vand.u32 %v44, 4294901760
    %1487 = vmatpush.msra.mxu0 %v1486
    %v1488 = vand.u32 %v43, 4294901760
    %1489 = vmatpush.msra.mxu0 %v1488
    %v1490 = vand.u32 %v1457, 4294901760
    %v1491 = vsub.f32 %v1457, %v1490
    %v1492 = vand.u32 %v1491, 4294901760
    %v1493 = vsub.f32 %v1491, %v1492
    %v1494 = vand.u32 %v1493, 4294901760
    %1495 = vmatmul.f32.gmra.mxu0 %v1494
    %v1496 = vpop.f32.mrf.mxu0
    %v1497 = vadd.f32 0.0, %v1496
    %1498 = vdwg.mxu0
    %v1499 = vand.u32 %v58, 4294901760
    %v1500 = vsub.f32 %v58, %v1499
    %v1501 = vand.u32 %v1500, 4294901760
    %v1502 = vsub.f32 %v1500, %v1501
    %v1503 = vand.u32 %v1502, 4294901760
    %1504 = vmatpush.msra.mxu0 %v1503
    %v1505 = vand.u32 %v57, 4294901760
    %v1506 = vsub.f32 %v57, %v1505
    %v1507 = vand.u32 %v1506, 4294901760
    %v1508 = vsub.f32 %v1506, %v1507
    %v1509 = vand.u32 %v1508, 4294901760
    %1510 = vmatpush.msra.mxu0 %v1509
    %v1511 = vand.u32 %v56, 4294901760
    %v1512 = vsub.f32 %v56, %v1511
    %v1513 = vand.u32 %v1512, 4294901760
    %v1514 = vsub.f32 %v1512, %v1513
    %v1515 = vand.u32 %v1514, 4294901760
    %1516 = vmatpush.msra.mxu0 %v1515
    %v1517 = vand.u32 %v55, 4294901760
    %v1518 = vsub.f32 %v55, %v1517
    %v1519 = vand.u32 %v1518, 4294901760
    %v1520 = vsub.f32 %v1518, %v1519
    %v1521 = vand.u32 %v1520, 4294901760
    %1522 = vmatpush.msra.mxu0 %v1521
    %v1523 = vand.u32 %v54, 4294901760
    %v1524 = vsub.f32 %v54, %v1523
    %v1525 = vand.u32 %v1524, 4294901760
    %v1526 = vsub.f32 %v1524, %v1525
    %v1527 = vand.u32 %v1526, 4294901760
    %1528 = vmatpush.msra.mxu0 %v1527
    %v1529 = vand.u32 %v53, 4294901760
    %v1530 = vsub.f32 %v53, %v1529
    %v1531 = vand.u32 %v1530, 4294901760
    %v1532 = vsub.f32 %v1530, %v1531
    %v1533 = vand.u32 %v1532, 4294901760
    %1534 = vmatpush.msra.mxu0 %v1533
    %v1535 = vand.u32 %v52, 4294901760
    %v1536 = vsub.f32 %v52, %v1535
    %v1537 = vand.u32 %v1536, 4294901760
    %v1538 = vsub.f32 %v1536, %v1537
    %v1539 = vand.u32 %v1538, 4294901760
    %1540 = vmatpush.msra.mxu0 %v1539
    %v1541 = vand.u32 %v51, 4294901760
    %v1542 = vsub.f32 %v51, %v1541
    %v1543 = vand.u32 %v1542, 4294901760
    %v1544 = vsub.f32 %v1542, %v1543
    %v1545 = vand.u32 %v1544, 4294901760
    %1546 = vmatpush.msra.mxu0 %v1545
    %v1547 = vand.u32 %v50, 4294901760
    %v1548 = vsub.f32 %v50, %v1547
    %v1549 = vand.u32 %v1548, 4294901760
    %v1550 = vsub.f32 %v1548, %v1549
    %v1551 = vand.u32 %v1550, 4294901760
    %1552 = vmatpush.msra.mxu0 %v1551
    %v1553 = vand.u32 %v49, 4294901760
    %v1554 = vsub.f32 %v49, %v1553
    %v1555 = vand.u32 %v1554, 4294901760
    %v1556 = vsub.f32 %v1554, %v1555
    %v1557 = vand.u32 %v1556, 4294901760
    %1558 = vmatpush.msra.mxu0 %v1557
    %v1559 = vand.u32 %v48, 4294901760
    %v1560 = vsub.f32 %v48, %v1559
    %v1561 = vand.u32 %v1560, 4294901760
    %v1562 = vsub.f32 %v1560, %v1561
    %v1563 = vand.u32 %v1562, 4294901760
    %1564 = vmatpush.msra.mxu0 %v1563
    %v1565 = vand.u32 %v47, 4294901760
    %v1566 = vsub.f32 %v47, %v1565
    %v1567 = vand.u32 %v1566, 4294901760
    %v1568 = vsub.f32 %v1566, %v1567
    %v1569 = vand.u32 %v1568, 4294901760
    %1570 = vmatpush.msra.mxu0 %v1569
    %v1571 = vand.u32 %v46, 4294901760
    %v1572 = vsub.f32 %v46, %v1571
    %v1573 = vand.u32 %v1572, 4294901760
    %v1574 = vsub.f32 %v1572, %v1573
    %v1575 = vand.u32 %v1574, 4294901760
    %1576 = vmatpush.msra.mxu0 %v1575
    %v1577 = vand.u32 %v45, 4294901760
    %v1578 = vsub.f32 %v45, %v1577
    %v1579 = vand.u32 %v1578, 4294901760
    %v1580 = vsub.f32 %v1578, %v1579
    %v1581 = vand.u32 %v1580, 4294901760
    %1582 = vmatpush.msra.mxu0 %v1581
    %v1583 = vand.u32 %v44, 4294901760
    %v1584 = vsub.f32 %v44, %v1583
    %v1585 = vand.u32 %v1584, 4294901760
    %v1586 = vsub.f32 %v1584, %v1585
    %v1587 = vand.u32 %v1586, 4294901760
    %1588 = vmatpush.msra.mxu0 %v1587
    %v1589 = vand.u32 %v43, 4294901760
    %v1590 = vsub.f32 %v43, %v1589
    %v1591 = vand.u32 %v1590, 4294901760
    %v1592 = vsub.f32 %v1590, %v1591
    %v1593 = vand.u32 %v1592, 4294901760
    %1594 = vmatpush.msra.mxu0 %v1593
    %v1595 = vand.u32 %v1457, 4294901760
    %1596 = vmatmul.f32.gmra.mxu0 %v1595
    %v1597 = vpop.f32.mrf.mxu0
    %v1598 = vadd.f32 %v1497, %v1597
    %1599 = vdwg.mxu0
    %v1600 = vand.u32 %v58, 4294901760
    %v1601 = vsub.f32 %v58, %v1600
    %1602 = vmatpush.msra.mxu0 %v1601
    %v1603 = vand.u32 %v57, 4294901760
    %v1604 = vsub.f32 %v57, %v1603
    %1605 = vmatpush.msra.mxu0 %v1604
    %v1606 = vand.u32 %v56, 4294901760
    %v1607 = vsub.f32 %v56, %v1606
    %1608 = vmatpush.msra.mxu0 %v1607
    %v1609 = vand.u32 %v55, 4294901760
    %v1610 = vsub.f32 %v55, %v1609
    %1611 = vmatpush.msra.mxu0 %v1610
    %v1612 = vand.u32 %v54, 4294901760
    %v1613 = vsub.f32 %v54, %v1612
    %1614 = vmatpush.msra.mxu0 %v1613
    %v1615 = vand.u32 %v53, 4294901760
    %v1616 = vsub.f32 %v53, %v1615
    %1617 = vmatpush.msra.mxu0 %v1616
    %v1618 = vand.u32 %v52, 4294901760
    %v1619 = vsub.f32 %v52, %v1618
    %1620 = vmatpush.msra.mxu0 %v1619
    %v1621 = vand.u32 %v51, 4294901760
    %v1622 = vsub.f32 %v51, %v1621
    %1623 = vmatpush.msra.mxu0 %v1622
    %v1624 = vand.u32 %v50, 4294901760
    %v1625 = vsub.f32 %v50, %v1624
    %1626 = vmatpush.msra.mxu0 %v1625
    %v1627 = vand.u32 %v49, 4294901760
    %v1628 = vsub.f32 %v49, %v1627
    %1629 = vmatpush.msra.mxu0 %v1628
    %v1630 = vand.u32 %v48, 4294901760
    %v1631 = vsub.f32 %v48, %v1630
    %1632 = vmatpush.msra.mxu0 %v1631
    %v1633 = vand.u32 %v47, 4294901760
    %v1634 = vsub.f32 %v47, %v1633
    %1635 = vmatpush.msra.mxu0 %v1634
    %v1636 = vand.u32 %v46, 4294901760
    %v1637 = vsub.f32 %v46, %v1636
    %1638 = vmatpush.msra.mxu0 %v1637
    %v1639 = vand.u32 %v45, 4294901760
    %v1640 = vsub.f32 %v45, %v1639
    %1641 = vmatpush.msra.mxu0 %v1640
    %v1642 = vand.u32 %v44, 4294901760
    %v1643 = vsub.f32 %v44, %v1642
    %1644 = vmatpush.msra.mxu0 %v1643
    %v1645 = vand.u32 %v43, 4294901760
    %v1646 = vsub.f32 %v43, %v1645
    %1647 = vmatpush.msra.mxu0 %v1646
    %v1648 = vand.u32 %v1457, 4294901760
    %v1649 = vsub.f32 %v1457, %v1648
    %1650 = vmatmul.f32.gmra.mxu0 %v1649
    %v1651 = vpop.f32.mrf.mxu0
    %v1652 = vadd.f32 %v1598, %v1651
    %1653 = vdwg.mxu0
    %v1654 = vand.u32 %v58, 4294901760
    %1655 = vmatpush.msra.mxu0 %v1654
    %v1656 = vand.u32 %v57, 4294901760
    %1657 = vmatpush.msra.mxu0 %v1656
    %v1658 = vand.u32 %v56, 4294901760
    %1659 = vmatpush.msra.mxu0 %v1658
    %v1660 = vand.u32 %v55, 4294901760
    %1661 = vmatpush.msra.mxu0 %v1660
    %v1662 = vand.u32 %v54, 4294901760
    %1663 = vmatpush.msra.mxu0 %v1662
    %v1664 = vand.u32 %v53, 4294901760
    %1665 = vmatpush.msra.mxu0 %v1664
    %v1666 = vand.u32 %v52, 4294901760
    %1667 = vmatpush.msra.mxu0 %v1666
    %v1668 = vand.u32 %v51, 4294901760
    %1669 = vmatpush.msra.mxu0 %v1668
    %v1670 = vand.u32 %v50, 4294901760
    %1671 = vmatpush.msra.mxu0 %v1670
    %v1672 = vand.u32 %v49, 4294901760
    %1673 = vmatpush.msra.mxu0 %v1672
    %v1674 = vand.u32 %v48, 4294901760
    %1675 = vmatpush.msra.mxu0 %v1674
    %v1676 = vand.u32 %v47, 4294901760
    %1677 = vmatpush.msra.mxu0 %v1676
    %v1678 = vand.u32 %v46, 4294901760
    %1679 = vmatpush.msra.mxu0 %v1678
    %v1680 = vand.u32 %v45, 4294901760
    %1681 = vmatpush.msra.mxu0 %v1680
    %v1682 = vand.u32 %v44, 4294901760
    %1683 = vmatpush.msra.mxu0 %v1682
    %v1684 = vand.u32 %v43, 4294901760
    %1685 = vmatpush.msra.mxu0 %v1684
    %v1686 = vand.u32 %v1457, 4294901760
    %v1687 = vsub.f32 %v1457, %v1686
    %v1688 = vand.u32 %v1687, 4294901760
    %1689 = vmatmul.f32.gmra.mxu0 %v1688
    %v1690 = vpop.f32.mrf.mxu0
    %v1691 = vadd.f32 %v1652, %v1690
    %1692 = vdwg.mxu0
    %v1693 = vand.u32 %v58, 4294901760
    %v1694 = vsub.f32 %v58, %v1693
    %v1695 = vand.u32 %v1694, 4294901760
    %1696 = vmatpush.msra.mxu0 %v1695
    %v1697 = vand.u32 %v57, 4294901760
    %v1698 = vsub.f32 %v57, %v1697
    %v1699 = vand.u32 %v1698, 4294901760
    %1700 = vmatpush.msra.mxu0 %v1699
    %v1701 = vand.u32 %v56, 4294901760
    %v1702 = vsub.f32 %v56, %v1701
    %v1703 = vand.u32 %v1702, 4294901760
    %1704 = vmatpush.msra.mxu0 %v1703
    %v1705 = vand.u32 %v55, 4294901760
    %v1706 = vsub.f32 %v55, %v1705
    %v1707 = vand.u32 %v1706, 4294901760
    %1708 = vmatpush.msra.mxu0 %v1707
    %v1709 = vand.u32 %v54, 4294901760
    %v1710 = vsub.f32 %v54, %v1709
    %v1711 = vand.u32 %v1710, 4294901760
    %1712 = vmatpush.msra.mxu0 %v1711
    %v1713 = vand.u32 %v53, 4294901760
    %v1714 = vsub.f32 %v53, %v1713
    %v1715 = vand.u32 %v1714, 4294901760
    %1716 = vmatpush.msra.mxu0 %v1715
    %v1717 = vand.u32 %v52, 4294901760
    %v1718 = vsub.f32 %v52, %v1717
    %v1719 = vand.u32 %v1718, 4294901760
    %1720 = vmatpush.msra.mxu0 %v1719
    %v1721 = vand.u32 %v51, 4294901760
    %v1722 = vsub.f32 %v51, %v1721
    %v1723 = vand.u32 %v1722, 4294901760
    %1724 = vmatpush.msra.mxu0 %v1723
    %v1725 = vand.u32 %v50, 4294901760
    %v1726 = vsub.f32 %v50, %v1725
    %v1727 = vand.u32 %v1726, 4294901760
    %1728 = vmatpush.msra.mxu0 %v1727
    %v1729 = vand.u32 %v49, 4294901760
    %v1730 = vsub.f32 %v49, %v1729
    %v1731 = vand.u32 %v1730, 4294901760
    %1732 = vmatpush.msra.mxu0 %v1731
    %v1733 = vand.u32 %v48, 4294901760
    %v1734 = vsub.f32 %v48, %v1733
    %v1735 = vand.u32 %v1734, 4294901760
    %1736 = vmatpush.msra.mxu0 %v1735
    %v1737 = vand.u32 %v47, 4294901760
    %v1738 = vsub.f32 %v47, %v1737
    %v1739 = vand.u32 %v1738, 4294901760
    %1740 = vmatpush.msra.mxu0 %v1739
    %v1741 = vand.u32 %v46, 4294901760
    %v1742 = vsub.f32 %v46, %v1741
    %v1743 = vand.u32 %v1742, 4294901760
    %1744 = vmatpush.msra.mxu0 %v1743
    %v1745 = vand.u32 %v45, 4294901760
    %v1746 = vsub.f32 %v45, %v1745
    %v1747 = vand.u32 %v1746, 4294901760
    %1748 = vmatpush.msra.mxu0 %v1747
    %v1749 = vand.u32 %v44, 4294901760
    %v1750 = vsub.f32 %v44, %v1749
    %v1751 = vand.u32 %v1750, 4294901760
    %1752 = vmatpush.msra.mxu0 %v1751
    %v1753 = vand.u32 %v43, 4294901760
    %v1754 = vsub.f32 %v43, %v1753
    %v1755 = vand.u32 %v1754, 4294901760
    %1756 = vmatpush.msra.mxu0 %v1755
    %v1757 = vand.u32 %v1457, 4294901760
    %1758 = vmatmul.f32.gmra.mxu0 %v1757
    %v1759 = vpop.f32.mrf.mxu0
    %v1760 = vadd.f32 %v1691, %v1759
    %1761 = vdwg.mxu0
    %v1762 = vand.u32 %v58, 4294901760
    %1763 = vmatpush.msra.mxu0 %v1762
    %v1764 = vand.u32 %v57, 4294901760
    %1765 = vmatpush.msra.mxu0 %v1764
    %v1766 = vand.u32 %v56, 4294901760
    %1767 = vmatpush.msra.mxu0 %v1766
    %v1768 = vand.u32 %v55, 4294901760
    %1769 = vmatpush.msra.mxu0 %v1768
    %v1770 = vand.u32 %v54, 4294901760
    %1771 = vmatpush.msra.mxu0 %v1770
    %v1772 = vand.u32 %v53, 4294901760
    %1773 = vmatpush.msra.mxu0 %v1772
    %v1774 = vand.u32 %v52, 4294901760
    %1775 = vmatpush.msra.mxu0 %v1774
    %v1776 = vand.u32 %v51, 4294901760
    %1777 = vmatpush.msra.mxu0 %v1776
    %v1778 = vand.u32 %v50, 4294901760
    %1779 = vmatpush.msra.mxu0 %v1778
    %v1780 = vand.u32 %v49, 4294901760
    %1781 = vmatpush.msra.mxu0 %v1780
    %v1782 = vand.u32 %v48, 4294901760
    %1783 = vmatpush.msra.mxu0 %v1782
    %v1784 = vand.u32 %v47, 4294901760
    %1785 = vmatpush.msra.mxu0 %v1784
    %v1786 = vand.u32 %v46, 4294901760
    %1787 = vmatpush.msra.mxu0 %v1786
    %v1788 = vand.u32 %v45, 4294901760
    %1789 = vmatpush.msra.mxu0 %v1788
    %v1790 = vand.u32 %v44, 4294901760
    %1791 = vmatpush.msra.mxu0 %v1790
    %v1792 = vand.u32 %v43, 4294901760
    %1793 = vmatpush.msra.mxu0 %v1792
    %v1794 = vand.u32 %v1457, 4294901760
    %1795 = vmatmul.f32.gmra.mxu0 %v1794
    %v1796 = vpop.f32.mrf.mxu0
    %v1797 = vadd.f32 %v1760, %v1796
    %1798 = vdwg.mxu0
    %v1799 = vmax.f32 %v1451, %v1797
    %1800 = vset.pattern.permute.xlu0 5
    %1801 = vperm.xlu0 %1800, %v42
    %v1802 = vpop.permute.xlu0 %1801
    %vm1803 = vcmp.eq.s32.totalorder %v1802, %v60
    %v1804 = vsel %vm1803, 1, 0
    %v1805 = vcvt.s32.f32 %v1804
    %v1806 = vand.u32 %v58, 4294901760
    %1807 = vmatpush.msra.mxu0 %v1806
    %v1808 = vand.u32 %v57, 4294901760
    %1809 = vmatpush.msra.mxu0 %v1808
    %v1810 = vand.u32 %v56, 4294901760
    %1811 = vmatpush.msra.mxu0 %v1810
    %v1812 = vand.u32 %v55, 4294901760
    %1813 = vmatpush.msra.mxu0 %v1812
    %v1814 = vand.u32 %v54, 4294901760
    %1815 = vmatpush.msra.mxu0 %v1814
    %v1816 = vand.u32 %v53, 4294901760
    %1817 = vmatpush.msra.mxu0 %v1816
    %v1818 = vand.u32 %v52, 4294901760
    %1819 = vmatpush.msra.mxu0 %v1818
    %v1820 = vand.u32 %v51, 4294901760
    %1821 = vmatpush.msra.mxu0 %v1820
    %v1822 = vand.u32 %v50, 4294901760
    %1823 = vmatpush.msra.mxu0 %v1822
    %v1824 = vand.u32 %v49, 4294901760
    %1825 = vmatpush.msra.mxu0 %v1824
    %v1826 = vand.u32 %v48, 4294901760
    %1827 = vmatpush.msra.mxu0 %v1826
    %v1828 = vand.u32 %v47, 4294901760
    %1829 = vmatpush.msra.mxu0 %v1828
    %v1830 = vand.u32 %v46, 4294901760
    %1831 = vmatpush.msra.mxu0 %v1830
    %v1832 = vand.u32 %v45, 4294901760
    %1833 = vmatpush.msra.mxu0 %v1832
    %v1834 = vand.u32 %v44, 4294901760
    %1835 = vmatpush.msra.mxu0 %v1834
    %v1836 = vand.u32 %v43, 4294901760
    %1837 = vmatpush.msra.mxu0 %v1836
    %v1838 = vand.u32 %v1805, 4294901760
    %v1839 = vsub.f32 %v1805, %v1838
    %v1840 = vand.u32 %v1839, 4294901760
    %v1841 = vsub.f32 %v1839, %v1840
    %v1842 = vand.u32 %v1841, 4294901760
    %1843 = vmatmul.f32.gmra.mxu0 %v1842
    %v1844 = vpop.f32.mrf.mxu0
    %v1845 = vadd.f32 0.0, %v1844
    %1846 = vdwg.mxu0
    %v1847 = vand.u32 %v58, 4294901760
    %v1848 = vsub.f32 %v58, %v1847
    %v1849 = vand.u32 %v1848, 4294901760
    %v1850 = vsub.f32 %v1848, %v1849
    %v1851 = vand.u32 %v1850, 4294901760
    %1852 = vmatpush.msra.mxu0 %v1851
    %v1853 = vand.u32 %v57, 4294901760
    %v1854 = vsub.f32 %v57, %v1853
    %v1855 = vand.u32 %v1854, 4294901760
    %v1856 = vsub.f32 %v1854, %v1855
    %v1857 = vand.u32 %v1856, 4294901760
    %1858 = vmatpush.msra.mxu0 %v1857
    %v1859 = vand.u32 %v56, 4294901760
    %v1860 = vsub.f32 %v56, %v1859
    %v1861 = vand.u32 %v1860, 4294901760
    %v1862 = vsub.f32 %v1860, %v1861
    %v1863 = vand.u32 %v1862, 4294901760
    %1864 = vmatpush.msra.mxu0 %v1863
    %v1865 = vand.u32 %v55, 4294901760
    %v1866 = vsub.f32 %v55, %v1865
    %v1867 = vand.u32 %v1866, 4294901760
    %v1868 = vsub.f32 %v1866, %v1867
    %v1869 = vand.u32 %v1868, 4294901760
    %1870 = vmatpush.msra.mxu0 %v1869
    %v1871 = vand.u32 %v54, 4294901760
    %v1872 = vsub.f32 %v54, %v1871
    %v1873 = vand.u32 %v1872, 4294901760
    %v1874 = vsub.f32 %v1872, %v1873
    %v1875 = vand.u32 %v1874, 4294901760
    %1876 = vmatpush.msra.mxu0 %v1875
    %v1877 = vand.u32 %v53, 4294901760
    %v1878 = vsub.f32 %v53, %v1877
    %v1879 = vand.u32 %v1878, 4294901760
    %v1880 = vsub.f32 %v1878, %v1879
    %v1881 = vand.u32 %v1880, 4294901760
    %1882 = vmatpush.msra.mxu0 %v1881
    %v1883 = vand.u32 %v52, 4294901760
    %v1884 = vsub.f32 %v52, %v1883
    %v1885 = vand.u32 %v1884, 4294901760
    %v1886 = vsub.f32 %v1884, %v1885
    %v1887 = vand.u32 %v1886, 4294901760
    %1888 = vmatpush.msra.mxu0 %v1887
    %v1889 = vand.u32 %v51, 4294901760
    %v1890 = vsub.f32 %v51, %v1889
    %v1891 = vand.u32 %v1890, 4294901760
    %v1892 = vsub.f32 %v1890, %v1891
    %v1893 = vand.u32 %v1892, 4294901760
    %1894 = vmatpush.msra.mxu0 %v1893
    %v1895 = vand.u32 %v50, 4294901760
    %v1896 = vsub.f32 %v50, %v1895
    %v1897 = vand.u32 %v1896, 4294901760
    %v1898 = vsub.f32 %v1896, %v1897
    %v1899 = vand.u32 %v1898, 4294901760
    %1900 = vmatpush.msra.mxu0 %v1899
    %v1901 = vand.u32 %v49, 4294901760
    %v1902 = vsub.f32 %v49, %v1901
    %v1903 = vand.u32 %v1902, 4294901760
    %v1904 = vsub.f32 %v1902, %v1903
    %v1905 = vand.u32 %v1904, 4294901760
    %1906 = vmatpush.msra.mxu0 %v1905
    %v1907 = vand.u32 %v48, 4294901760
    %v1908 = vsub.f32 %v48, %v1907
    %v1909 = vand.u32 %v1908, 4294901760
    %v1910 = vsub.f32 %v1908, %v1909
    %v1911 = vand.u32 %v1910, 4294901760
    %1912 = vmatpush.msra.mxu0 %v1911
    %v1913 = vand.u32 %v47, 4294901760
    %v1914 = vsub.f32 %v47, %v1913
    %v1915 = vand.u32 %v1914, 4294901760
    %v1916 = vsub.f32 %v1914, %v1915
    %v1917 = vand.u32 %v1916, 4294901760
    %1918 = vmatpush.msra.mxu0 %v1917
    %v1919 = vand.u32 %v46, 4294901760
    %v1920 = vsub.f32 %v46, %v1919
    %v1921 = vand.u32 %v1920, 4294901760
    %v1922 = vsub.f32 %v1920, %v1921
    %v1923 = vand.u32 %v1922, 4294901760
    %1924 = vmatpush.msra.mxu0 %v1923
    %v1925 = vand.u32 %v45, 4294901760
    %v1926 = vsub.f32 %v45, %v1925
    %v1927 = vand.u32 %v1926, 4294901760
    %v1928 = vsub.f32 %v1926, %v1927
    %v1929 = vand.u32 %v1928, 4294901760
    %1930 = vmatpush.msra.mxu0 %v1929
    %v1931 = vand.u32 %v44, 4294901760
    %v1932 = vsub.f32 %v44, %v1931
    %v1933 = vand.u32 %v1932, 4294901760
    %v1934 = vsub.f32 %v1932, %v1933
    %v1935 = vand.u32 %v1934, 4294901760
    %1936 = vmatpush.msra.mxu0 %v1935
    %v1937 = vand.u32 %v43, 4294901760
    %v1938 = vsub.f32 %v43, %v1937
    %v1939 = vand.u32 %v1938, 4294901760
    %v1940 = vsub.f32 %v1938, %v1939
    %v1941 = vand.u32 %v1940, 4294901760
    %1942 = vmatpush.msra.mxu0 %v1941
    %v1943 = vand.u32 %v1805, 4294901760
    %1944 = vmatmul.f32.gmra.mxu0 %v1943
    %v1945 = vpop.f32.mrf.mxu0
    %v1946 = vadd.f32 %v1845, %v1945
    %1947 = vdwg.mxu0
    %v1948 = vand.u32 %v58, 4294901760
    %v1949 = vsub.f32 %v58, %v1948
    %1950 = vmatpush.msra.mxu0 %v1949
    %v1951 = vand.u32 %v57, 4294901760
    %v1952 = vsub.f32 %v57, %v1951
    %1953 = vmatpush.msra.mxu0 %v1952
    %v1954 = vand.u32 %v56, 4294901760
    %v1955 = vsub.f32 %v56, %v1954
    %1956 = vmatpush.msra.mxu0 %v1955
    %v1957 = vand.u32 %v55, 4294901760
    %v1958 = vsub.f32 %v55, %v1957
    %1959 = vmatpush.msra.mxu0 %v1958
    %v1960 = vand.u32 %v54, 4294901760
    %v1961 = vsub.f32 %v54, %v1960
    %1962 = vmatpush.msra.mxu0 %v1961
    %v1963 = vand.u32 %v53, 4294901760
    %v1964 = vsub.f32 %v53, %v1963
    %1965 = vmatpush.msra.mxu0 %v1964
    %v1966 = vand.u32 %v52, 4294901760
    %v1967 = vsub.f32 %v52, %v1966
    %1968 = vmatpush.msra.mxu0 %v1967
    %v1969 = vand.u32 %v51, 4294901760
    %v1970 = vsub.f32 %v51, %v1969
    %1971 = vmatpush.msra.mxu0 %v1970
    %v1972 = vand.u32 %v50, 4294901760
    %v1973 = vsub.f32 %v50, %v1972
    %1974 = vmatpush.msra.mxu0 %v1973
    %v1975 = vand.u32 %v49, 4294901760
    %v1976 = vsub.f32 %v49, %v1975
    %1977 = vmatpush.msra.mxu0 %v1976
    %v1978 = vand.u32 %v48, 4294901760
    %v1979 = vsub.f32 %v48, %v1978
    %1980 = vmatpush.msra.mxu0 %v1979
    %v1981 = vand.u32 %v47, 4294901760
    %v1982 = vsub.f32 %v47, %v1981
    %1983 = vmatpush.msra.mxu0 %v1982
    %v1984 = vand.u32 %v46, 4294901760
    %v1985 = vsub.f32 %v46, %v1984
    %1986 = vmatpush.msra.mxu0 %v1985
    %v1987 = vand.u32 %v45, 4294901760
    %v1988 = vsub.f32 %v45, %v1987
    %1989 = vmatpush.msra.mxu0 %v1988
    %v1990 = vand.u32 %v44, 4294901760
    %v1991 = vsub.f32 %v44, %v1990
    %1992 = vmatpush.msra.mxu0 %v1991
    %v1993 = vand.u32 %v43, 4294901760
    %v1994 = vsub.f32 %v43, %v1993
    %1995 = vmatpush.msra.mxu0 %v1994
    %v1996 = vand.u32 %v1805, 4294901760
    %v1997 = vsub.f32 %v1805, %v1996
    %1998 = vmatmul.f32.gmra.mxu0 %v1997
    %v1999 = vpop.f32.mrf.mxu0
    %v2000 = vadd.f32 %v1946, %v1999
    %2001 = vdwg.mxu0
    %v2002 = vand.u32 %v58, 4294901760
    %2003 = vmatpush.msra.mxu0 %v2002
    %v2004 = vand.u32 %v57, 4294901760
    %2005 = vmatpush.msra.mxu0 %v2004
    %v2006 = vand.u32 %v56, 4294901760
    %2007 = vmatpush.msra.mxu0 %v2006
    %v2008 = vand.u32 %v55, 4294901760
    %2009 = vmatpush.msra.mxu0 %v2008
    %v2010 = vand.u32 %v54, 4294901760
    %2011 = vmatpush.msra.mxu0 %v2010
    %v2012 = vand.u32 %v53, 4294901760
    %2013 = vmatpush.msra.mxu0 %v2012
    %v2014 = vand.u32 %v52, 4294901760
    %2015 = vmatpush.msra.mxu0 %v2014
    %v2016 = vand.u32 %v51, 4294901760
    %2017 = vmatpush.msra.mxu0 %v2016
    %v2018 = vand.u32 %v50, 4294901760
    %2019 = vmatpush.msra.mxu0 %v2018
    %v2020 = vand.u32 %v49, 4294901760
    %2021 = vmatpush.msra.mxu0 %v2020
    %v2022 = vand.u32 %v48, 4294901760
    %2023 = vmatpush.msra.mxu0 %v2022
    %v2024 = vand.u32 %v47, 4294901760
    %2025 = vmatpush.msra.mxu0 %v2024
    %v2026 = vand.u32 %v46, 4294901760
    %2027 = vmatpush.msra.mxu0 %v2026
    %v2028 = vand.u32 %v45, 4294901760
    %2029 = vmatpush.msra.mxu0 %v2028
    %v2030 = vand.u32 %v44, 4294901760
    %2031 = vmatpush.msra.mxu0 %v2030
    %v2032 = vand.u32 %v43, 4294901760
    %2033 = vmatpush.msra.mxu0 %v2032
    %v2034 = vand.u32 %v1805, 4294901760
    %v2035 = vsub.f32 %v1805, %v2034
    %v2036 = vand.u32 %v2035, 4294901760
    %2037 = vmatmul.f32.gmra.mxu0 %v2036
    %v2038 = vpop.f32.mrf.mxu0
    %v2039 = vadd.f32 %v2000, %v2038
    %2040 = vdwg.mxu0
    %v2041 = vand.u32 %v58, 4294901760
    %v2042 = vsub.f32 %v58, %v2041
    %v2043 = vand.u32 %v2042, 4294901760
    %2044 = vmatpush.msra.mxu0 %v2043
    %v2045 = vand.u32 %v57, 4294901760
    %v2046 = vsub.f32 %v57, %v2045
    %v2047 = vand.u32 %v2046, 4294901760
    %2048 = vmatpush.msra.mxu0 %v2047
    %v2049 = vand.u32 %v56, 4294901760
    %v2050 = vsub.f32 %v56, %v2049
    %v2051 = vand.u32 %v2050, 4294901760
    %2052 = vmatpush.msra.mxu0 %v2051
    %v2053 = vand.u32 %v55, 4294901760
    %v2054 = vsub.f32 %v55, %v2053
    %v2055 = vand.u32 %v2054, 4294901760
    %2056 = vmatpush.msra.mxu0 %v2055
    %v2057 = vand.u32 %v54, 4294901760
    %v2058 = vsub.f32 %v54, %v2057
    %v2059 = vand.u32 %v2058, 4294901760
    %2060 = vmatpush.msra.mxu0 %v2059
    %v2061 = vand.u32 %v53, 4294901760
    %v2062 = vsub.f32 %v53, %v2061
    %v2063 = vand.u32 %v2062, 4294901760
    %2064 = vmatpush.msra.mxu0 %v2063
    %v2065 = vand.u32 %v52, 4294901760
    %v2066 = vsub.f32 %v52, %v2065
    %v2067 = vand.u32 %v2066, 4294901760
    %2068 = vmatpush.msra.mxu0 %v2067
    %v2069 = vand.u32 %v51, 4294901760
    %v2070 = vsub.f32 %v51, %v2069
    %v2071 = vand.u32 %v2070, 4294901760
    %2072 = vmatpush.msra.mxu0 %v2071
    %v2073 = vand.u32 %v50, 4294901760
    %v2074 = vsub.f32 %v50, %v2073
    %v2075 = vand.u32 %v2074, 4294901760
    %2076 = vmatpush.msra.mxu0 %v2075
    %v2077 = vand.u32 %v49, 4294901760
    %v2078 = vsub.f32 %v49, %v2077
    %v2079 = vand.u32 %v2078, 4294901760
    %2080 = vmatpush.msra.mxu0 %v2079
    %v2081 = vand.u32 %v48, 4294901760
    %v2082 = vsub.f32 %v48, %v2081
    %v2083 = vand.u32 %v2082, 4294901760
    %2084 = vmatpush.msra.mxu0 %v2083
    %v2085 = vand.u32 %v47, 4294901760
    %v2086 = vsub.f32 %v47, %v2085
    %v2087 = vand.u32 %v2086, 4294901760
    %2088 = vmatpush.msra.mxu0 %v2087
    %v2089 = vand.u32 %v46, 4294901760
    %v2090 = vsub.f32 %v46, %v2089
    %v2091 = vand.u32 %v2090, 4294901760
    %2092 = vmatpush.msra.mxu0 %v2091
    %v2093 = vand.u32 %v45, 4294901760
    %v2094 = vsub.f32 %v45, %v2093
    %v2095 = vand.u32 %v2094, 4294901760
    %2096 = vmatpush.msra.mxu0 %v2095
    %v2097 = vand.u32 %v44, 4294901760
    %v2098 = vsub.f32 %v44, %v2097
    %v2099 = vand.u32 %v2098, 4294901760
    %2100 = vmatpush.msra.mxu0 %v2099
    %v2101 = vand.u32 %v43, 4294901760
    %v2102 = vsub.f32 %v43, %v2101
    %v2103 = vand.u32 %v2102, 4294901760
    %2104 = vmatpush.msra.mxu0 %v2103
    %v2105 = vand.u32 %v1805, 4294901760
    %2106 = vmatmul.f32.gmra.mxu0 %v2105
    %v2107 = vpop.f32.mrf.mxu0
    %v2108 = vadd.f32 %v2039, %v2107
    %2109 = vdwg.mxu0
    %v2110 = vand.u32 %v58, 4294901760
    %2111 = vmatpush.msra.mxu0 %v2110
    %v2112 = vand.u32 %v57, 4294901760
    %2113 = vmatpush.msra.mxu0 %v2112
    %v2114 = vand.u32 %v56, 4294901760
    %2115 = vmatpush.msra.mxu0 %v2114
    %v2116 = vand.u32 %v55, 4294901760
    %2117 = vmatpush.msra.mxu0 %v2116
    %v2118 = vand.u32 %v54, 4294901760
    %2119 = vmatpush.msra.mxu0 %v2118
    %v2120 = vand.u32 %v53, 4294901760
    %2121 = vmatpush.msra.mxu0 %v2120
    %v2122 = vand.u32 %v52, 4294901760
    %2123 = vmatpush.msra.mxu0 %v2122
    %v2124 = vand.u32 %v51, 4294901760
    %2125 = vmatpush.msra.mxu0 %v2124
    %v2126 = vand.u32 %v50, 4294901760
    %2127 = vmatpush.msra.mxu0 %v2126
    %v2128 = vand.u32 %v49, 4294901760
    %2129 = vmatpush.msra.mxu0 %v2128
    %v2130 = vand.u32 %v48, 4294901760
    %2131 = vmatpush.msra.mxu0 %v2130
    %v2132 = vand.u32 %v47, 4294901760
    %2133 = vmatpush.msra.mxu0 %v2132
    %v2134 = vand.u32 %v46, 4294901760
    %2135 = vmatpush.msra.mxu0 %v2134
    %v2136 = vand.u32 %v45, 4294901760
    %2137 = vmatpush.msra.mxu0 %v2136
    %v2138 = vand.u32 %v44, 4294901760
    %2139 = vmatpush.msra.mxu0 %v2138
    %v2140 = vand.u32 %v43, 4294901760
    %2141 = vmatpush.msra.mxu0 %v2140
    %v2142 = vand.u32 %v1805, 4294901760
    %2143 = vmatmul.f32.gmra.mxu0 %v2142
    %v2144 = vpop.f32.mrf.mxu0
    %v2145 = vadd.f32 %v2108, %v2144
    %2146 = vdwg.mxu0
    %v2147 = vmax.f32 %v1799, %v2145
    %2148 = vset.pattern.permute.xlu0 6
    %2149 = vperm.xlu0 %2148, %v42
    %v2150 = vpop.permute.xlu0 %2149
    %vm2151 = vcmp.eq.s32.totalorder %v2150, %v60
    %v2152 = vsel %vm2151, 1, 0
    %v2153 = vcvt.s32.f32 %v2152
    %v2154 = vand.u32 %v58, 4294901760
    %2155 = vmatpush.msra.mxu0 %v2154
    %v2156 = vand.u32 %v57, 4294901760
    %2157 = vmatpush.msra.mxu0 %v2156
    %v2158 = vand.u32 %v56, 4294901760
    %2159 = vmatpush.msra.mxu0 %v2158
    %v2160 = vand.u32 %v55, 4294901760
    %2161 = vmatpush.msra.mxu0 %v2160
    %v2162 = vand.u32 %v54, 4294901760
    %2163 = vmatpush.msra.mxu0 %v2162
    %v2164 = vand.u32 %v53, 4294901760
    %2165 = vmatpush.msra.mxu0 %v2164
    %v2166 = vand.u32 %v52, 4294901760
    %2167 = vmatpush.msra.mxu0 %v2166
    %v2168 = vand.u32 %v51, 4294901760
    %2169 = vmatpush.msra.mxu0 %v2168
    %v2170 = vand.u32 %v50, 4294901760
    %2171 = vmatpush.msra.mxu0 %v2170
    %v2172 = vand.u32 %v49, 4294901760
    %2173 = vmatpush.msra.mxu0 %v2172
    %v2174 = vand.u32 %v48, 4294901760
    %2175 = vmatpush.msra.mxu0 %v2174
    %v2176 = vand.u32 %v47, 4294901760
    %2177 = vmatpush.msra.mxu0 %v2176
    %v2178 = vand.u32 %v46, 4294901760
    %2179 = vmatpush.msra.mxu0 %v2178
    %v2180 = vand.u32 %v45, 4294901760
    %2181 = vmatpush.msra.mxu0 %v2180
    %v2182 = vand.u32 %v44, 4294901760
    %2183 = vmatpush.msra.mxu0 %v2182
    %v2184 = vand.u32 %v43, 4294901760
    %2185 = vmatpush.msra.mxu0 %v2184
    %v2186 = vand.u32 %v2153, 4294901760
    %v2187 = vsub.f32 %v2153, %v2186
    %v2188 = vand.u32 %v2187, 4294901760
    %v2189 = vsub.f32 %v2187, %v2188
    %v2190 = vand.u32 %v2189, 4294901760
    %2191 = vmatmul.f32.gmra.mxu0 %v2190
    %v2192 = vpop.f32.mrf.mxu0
    %v2193 = vadd.f32 0.0, %v2192
    %2194 = vdwg.mxu0
    %v2195 = vand.u32 %v58, 4294901760
    %v2196 = vsub.f32 %v58, %v2195
    %v2197 = vand.u32 %v2196, 4294901760
    %v2198 = vsub.f32 %v2196, %v2197
    %v2199 = vand.u32 %v2198, 4294901760
    %2200 = vmatpush.msra.mxu0 %v2199
    %v2201 = vand.u32 %v57, 4294901760
    %v2202 = vsub.f32 %v57, %v2201
    %v2203 = vand.u32 %v2202, 4294901760
    %v2204 = vsub.f32 %v2202, %v2203
    %v2205 = vand.u32 %v2204, 4294901760
    %2206 = vmatpush.msra.mxu0 %v2205
    %v2207 = vand.u32 %v56, 4294901760
    %v2208 = vsub.f32 %v56, %v2207
    %v2209 = vand.u32 %v2208, 4294901760
    %v2210 = vsub.f32 %v2208, %v2209
    %v2211 = vand.u32 %v2210, 4294901760
    %2212 = vmatpush.msra.mxu0 %v2211
    %v2213 = vand.u32 %v55, 4294901760
    %v2214 = vsub.f32 %v55, %v2213
    %v2215 = vand.u32 %v2214, 4294901760
    %v2216 = vsub.f32 %v2214, %v2215
    %v2217 = vand.u32 %v2216, 4294901760
    %2218 = vmatpush.msra.mxu0 %v2217
    %v2219 = vand.u32 %v54, 4294901760
    %v2220 = vsub.f32 %v54, %v2219
    %v2221 = vand.u32 %v2220, 4294901760
    %v2222 = vsub.f32 %v2220, %v2221
    %v2223 = vand.u32 %v2222, 4294901760
    %2224 = vmatpush.msra.mxu0 %v2223
    %v2225 = vand.u32 %v53, 4294901760
    %v2226 = vsub.f32 %v53, %v2225
    %v2227 = vand.u32 %v2226, 4294901760
    %v2228 = vsub.f32 %v2226, %v2227
    %v2229 = vand.u32 %v2228, 4294901760
    %2230 = vmatpush.msra.mxu0 %v2229
    %v2231 = vand.u32 %v52, 4294901760
    %v2232 = vsub.f32 %v52, %v2231
    %v2233 = vand.u32 %v2232, 4294901760
    %v2234 = vsub.f32 %v2232, %v2233
    %v2235 = vand.u32 %v2234, 4294901760
    %2236 = vmatpush.msra.mxu0 %v2235
    %v2237 = vand.u32 %v51, 4294901760
    %v2238 = vsub.f32 %v51, %v2237
    %v2239 = vand.u32 %v2238, 4294901760
    %v2240 = vsub.f32 %v2238, %v2239
    %v2241 = vand.u32 %v2240, 4294901760
    %2242 = vmatpush.msra.mxu0 %v2241
    %v2243 = vand.u32 %v50, 4294901760
    %v2244 = vsub.f32 %v50, %v2243
    %v2245 = vand.u32 %v2244, 4294901760
    %v2246 = vsub.f32 %v2244, %v2245
    %v2247 = vand.u32 %v2246, 4294901760
    %2248 = vmatpush.msra.mxu0 %v2247
    %v2249 = vand.u32 %v49, 4294901760
    %v2250 = vsub.f32 %v49, %v2249
    %v2251 = vand.u32 %v2250, 4294901760
    %v2252 = vsub.f32 %v2250, %v2251
    %v2253 = vand.u32 %v2252, 4294901760
    %2254 = vmatpush.msra.mxu0 %v2253
    %v2255 = vand.u32 %v48, 4294901760
    %v2256 = vsub.f32 %v48, %v2255
    %v2257 = vand.u32 %v2256, 4294901760
    %v2258 = vsub.f32 %v2256, %v2257
    %v2259 = vand.u32 %v2258, 4294901760
    %2260 = vmatpush.msra.mxu0 %v2259
    %v2261 = vand.u32 %v47, 4294901760
    %v2262 = vsub.f32 %v47, %v2261
    %v2263 = vand.u32 %v2262, 4294901760
    %v2264 = vsub.f32 %v2262, %v2263
    %v2265 = vand.u32 %v2264, 4294901760
    %2266 = vmatpush.msra.mxu0 %v2265
    %v2267 = vand.u32 %v46, 4294901760
    %v2268 = vsub.f32 %v46, %v2267
    %v2269 = vand.u32 %v2268, 4294901760
    %v2270 = vsub.f32 %v2268, %v2269
    %v2271 = vand.u32 %v2270, 4294901760
    %2272 = vmatpush.msra.mxu0 %v2271
    %v2273 = vand.u32 %v45, 4294901760
    %v2274 = vsub.f32 %v45, %v2273
    %v2275 = vand.u32 %v2274, 4294901760
    %v2276 = vsub.f32 %v2274, %v2275
    %v2277 = vand.u32 %v2276, 4294901760
    %2278 = vmatpush.msra.mxu0 %v2277
    %v2279 = vand.u32 %v44, 4294901760
    %v2280 = vsub.f32 %v44, %v2279
    %v2281 = vand.u32 %v2280, 4294901760
    %v2282 = vsub.f32 %v2280, %v2281
    %v2283 = vand.u32 %v2282, 4294901760
    %2284 = vmatpush.msra.mxu0 %v2283
    %v2285 = vand.u32 %v43, 4294901760
    %v2286 = vsub.f32 %v43, %v2285
    %v2287 = vand.u32 %v2286, 4294901760
    %v2288 = vsub.f32 %v2286, %v2287
    %v2289 = vand.u32 %v2288, 4294901760
    %2290 = vmatpush.msra.mxu0 %v2289
    %v2291 = vand.u32 %v2153, 4294901760
    %2292 = vmatmul.f32.gmra.mxu0 %v2291
    %v2293 = vpop.f32.mrf.mxu0
    %v2294 = vadd.f32 %v2193, %v2293
    %2295 = vdwg.mxu0
    %v2296 = vand.u32 %v58, 4294901760
    %v2297 = vsub.f32 %v58, %v2296
    %2298 = vmatpush.msra.mxu0 %v2297
    %v2299 = vand.u32 %v57, 4294901760
    %v2300 = vsub.f32 %v57, %v2299
    %2301 = vmatpush.msra.mxu0 %v2300
    %v2302 = vand.u32 %v56, 4294901760
    %v2303 = vsub.f32 %v56, %v2302
    %2304 = vmatpush.msra.mxu0 %v2303
    %v2305 = vand.u32 %v55, 4294901760
    %v2306 = vsub.f32 %v55, %v2305
    %2307 = vmatpush.msra.mxu0 %v2306
    %v2308 = vand.u32 %v54, 4294901760
    %v2309 = vsub.f32 %v54, %v2308
    %2310 = vmatpush.msra.mxu0 %v2309
    %v2311 = vand.u32 %v53, 4294901760
    %v2312 = vsub.f32 %v53, %v2311
    %2313 = vmatpush.msra.mxu0 %v2312
    %v2314 = vand.u32 %v52, 4294901760
    %v2315 = vsub.f32 %v52, %v2314
    %2316 = vmatpush.msra.mxu0 %v2315
    %v2317 = vand.u32 %v51, 4294901760
    %v2318 = vsub.f32 %v51, %v2317
    %2319 = vmatpush.msra.mxu0 %v2318
    %v2320 = vand.u32 %v50, 4294901760
    %v2321 = vsub.f32 %v50, %v2320
    %2322 = vmatpush.msra.mxu0 %v2321
    %v2323 = vand.u32 %v49, 4294901760
    %v2324 = vsub.f32 %v49, %v2323
    %2325 = vmatpush.msra.mxu0 %v2324
    %v2326 = vand.u32 %v48, 4294901760
    %v2327 = vsub.f32 %v48, %v2326
    %2328 = vmatpush.msra.mxu0 %v2327
    %v2329 = vand.u32 %v47, 4294901760
    %v2330 = vsub.f32 %v47, %v2329
    %2331 = vmatpush.msra.mxu0 %v2330
    %v2332 = vand.u32 %v46, 4294901760
    %v2333 = vsub.f32 %v46, %v2332
    %2334 = vmatpush.msra.mxu0 %v2333
    %v2335 = vand.u32 %v45, 4294901760
    %v2336 = vsub.f32 %v45, %v2335
    %2337 = vmatpush.msra.mxu0 %v2336
    %v2338 = vand.u32 %v44, 4294901760
    %v2339 = vsub.f32 %v44, %v2338
    %2340 = vmatpush.msra.mxu0 %v2339
    %v2341 = vand.u32 %v43, 4294901760
    %v2342 = vsub.f32 %v43, %v2341
    %2343 = vmatpush.msra.mxu0 %v2342
    %v2344 = vand.u32 %v2153, 4294901760
    %v2345 = vsub.f32 %v2153, %v2344
    %2346 = vmatmul.f32.gmra.mxu0 %v2345
    %v2347 = vpop.f32.mrf.mxu0
    %v2348 = vadd.f32 %v2294, %v2347
    %2349 = vdwg.mxu0
    %v2350 = vand.u32 %v58, 4294901760
    %2351 = vmatpush.msra.mxu0 %v2350
    %v2352 = vand.u32 %v57, 4294901760
    %2353 = vmatpush.msra.mxu0 %v2352
    %v2354 = vand.u32 %v56, 4294901760
    %2355 = vmatpush.msra.mxu0 %v2354
    %v2356 = vand.u32 %v55, 4294901760
    %2357 = vmatpush.msra.mxu0 %v2356
    %v2358 = vand.u32 %v54, 4294901760
    %2359 = vmatpush.msra.mxu0 %v2358
    %v2360 = vand.u32 %v53, 4294901760
    %2361 = vmatpush.msra.mxu0 %v2360
    %v2362 = vand.u32 %v52, 4294901760
    %2363 = vmatpush.msra.mxu0 %v2362
    %v2364 = vand.u32 %v51, 4294901760
    %2365 = vmatpush.msra.mxu0 %v2364
    %v2366 = vand.u32 %v50, 4294901760
    %2367 = vmatpush.msra.mxu0 %v2366
    %v2368 = vand.u32 %v49, 4294901760
    %2369 = vmatpush.msra.mxu0 %v2368
    %v2370 = vand.u32 %v48, 4294901760
    %2371 = vmatpush.msra.mxu0 %v2370
    %v2372 = vand.u32 %v47, 4294901760
    %2373 = vmatpush.msra.mxu0 %v2372
    %v2374 = vand.u32 %v46, 4294901760
    %2375 = vmatpush.msra.mxu0 %v2374
    %v2376 = vand.u32 %v45, 4294901760
    %2377 = vmatpush.msra.mxu0 %v2376
    %v2378 = vand.u32 %v44, 4294901760
    %2379 = vmatpush.msra.mxu0 %v2378
    %v2380 = vand.u32 %v43, 4294901760
    %2381 = vmatpush.msra.mxu0 %v2380
    %v2382 = vand.u32 %v2153, 4294901760
    %v2383 = vsub.f32 %v2153, %v2382
    %v2384 = vand.u32 %v2383, 4294901760
    %2385 = vmatmul.f32.gmra.mxu0 %v2384
    %v2386 = vpop.f32.mrf.mxu0
    %v2387 = vadd.f32 %v2348, %v2386
    %2388 = vdwg.mxu0
    %v2389 = vand.u32 %v58, 4294901760
    %v2390 = vsub.f32 %v58, %v2389
    %v2391 = vand.u32 %v2390, 4294901760
    %2392 = vmatpush.msra.mxu0 %v2391
    %v2393 = vand.u32 %v57, 4294901760
    %v2394 = vsub.f32 %v57, %v2393
    %v2395 = vand.u32 %v2394, 4294901760
    %2396 = vmatpush.msra.mxu0 %v2395
    %v2397 = vand.u32 %v56, 4294901760
    %v2398 = vsub.f32 %v56, %v2397
    %v2399 = vand.u32 %v2398, 4294901760
    %2400 = vmatpush.msra.mxu0 %v2399
    %v2401 = vand.u32 %v55, 4294901760
    %v2402 = vsub.f32 %v55, %v2401
    %v2403 = vand.u32 %v2402, 4294901760
    %2404 = vmatpush.msra.mxu0 %v2403
    %v2405 = vand.u32 %v54, 4294901760
    %v2406 = vsub.f32 %v54, %v2405
    %v2407 = vand.u32 %v2406, 4294901760
    %2408 = vmatpush.msra.mxu0 %v2407
    %v2409 = vand.u32 %v53, 4294901760
    %v2410 = vsub.f32 %v53, %v2409
    %v2411 = vand.u32 %v2410, 4294901760
    %2412 = vmatpush.msra.mxu0 %v2411
    %v2413 = vand.u32 %v52, 4294901760
    %v2414 = vsub.f32 %v52, %v2413
    %v2415 = vand.u32 %v2414, 4294901760
    %2416 = vmatpush.msra.mxu0 %v2415
    %v2417 = vand.u32 %v51, 4294901760
    %v2418 = vsub.f32 %v51, %v2417
    %v2419 = vand.u32 %v2418, 4294901760
    %2420 = vmatpush.msra.mxu0 %v2419
    %v2421 = vand.u32 %v50, 4294901760
    %v2422 = vsub.f32 %v50, %v2421
    %v2423 = vand.u32 %v2422, 4294901760
    %2424 = vmatpush.msra.mxu0 %v2423
    %v2425 = vand.u32 %v49, 4294901760
    %v2426 = vsub.f32 %v49, %v2425
    %v2427 = vand.u32 %v2426, 4294901760
    %2428 = vmatpush.msra.mxu0 %v2427
    %v2429 = vand.u32 %v48, 4294901760
    %v2430 = vsub.f32 %v48, %v2429
    %v2431 = vand.u32 %v2430, 4294901760
    %2432 = vmatpush.msra.mxu0 %v2431
    %v2433 = vand.u32 %v47, 4294901760
    %v2434 = vsub.f32 %v47, %v2433
    %v2435 = vand.u32 %v2434, 4294901760
    %2436 = vmatpush.msra.mxu0 %v2435
    %v2437 = vand.u32 %v46, 4294901760
    %v2438 = vsub.f32 %v46, %v2437
    %v2439 = vand.u32 %v2438, 4294901760
    %2440 = vmatpush.msra.mxu0 %v2439
    %v2441 = vand.u32 %v45, 4294901760
    %v2442 = vsub.f32 %v45, %v2441
    %v2443 = vand.u32 %v2442, 4294901760
    %2444 = vmatpush.msra.mxu0 %v2443
    %v2445 = vand.u32 %v44, 4294901760
    %v2446 = vsub.f32 %v44, %v2445
    %v2447 = vand.u32 %v2446, 4294901760
    %2448 = vmatpush.msra.mxu0 %v2447
    %v2449 = vand.u32 %v43, 4294901760
    %v2450 = vsub.f32 %v43, %v2449
    %v2451 = vand.u32 %v2450, 4294901760
    %2452 = vmatpush.msra.mxu0 %v2451
    %v2453 = vand.u32 %v2153, 4294901760
    %2454 = vmatmul.f32.gmra.mxu0 %v2453
    %v2455 = vpop.f32.mrf.mxu0
    %v2456 = vadd.f32 %v2387, %v2455
    %2457 = vdwg.mxu0
    %v2458 = vand.u32 %v58, 4294901760
    %2459 = vmatpush.msra.mxu0 %v2458
    %v2460 = vand.u32 %v57, 4294901760
    %2461 = vmatpush.msra.mxu0 %v2460
    %v2462 = vand.u32 %v56, 4294901760
    %2463 = vmatpush.msra.mxu0 %v2462
    %v2464 = vand.u32 %v55, 4294901760
    %2465 = vmatpush.msra.mxu0 %v2464
    %v2466 = vand.u32 %v54, 4294901760
    %2467 = vmatpush.msra.mxu0 %v2466
    %v2468 = vand.u32 %v53, 4294901760
    %2469 = vmatpush.msra.mxu0 %v2468
    %v2470 = vand.u32 %v52, 4294901760
    %2471 = vmatpush.msra.mxu0 %v2470
    %v2472 = vand.u32 %v51, 4294901760
    %2473 = vmatpush.msra.mxu0 %v2472
    %v2474 = vand.u32 %v50, 4294901760
    %2475 = vmatpush.msra.mxu0 %v2474
    %v2476 = vand.u32 %v49, 4294901760
    %2477 = vmatpush.msra.mxu0 %v2476
    %v2478 = vand.u32 %v48, 4294901760
    %2479 = vmatpush.msra.mxu0 %v2478
    %v2480 = vand.u32 %v47, 4294901760
    %2481 = vmatpush.msra.mxu0 %v2480
    %v2482 = vand.u32 %v46, 4294901760
    %2483 = vmatpush.msra.mxu0 %v2482
    %v2484 = vand.u32 %v45, 4294901760
    %2485 = vmatpush.msra.mxu0 %v2484
    %v2486 = vand.u32 %v44, 4294901760
    %2487 = vmatpush.msra.mxu0 %v2486
    %v2488 = vand.u32 %v43, 4294901760
    %2489 = vmatpush.msra.mxu0 %v2488
    %v2490 = vand.u32 %v2153, 4294901760
    %2491 = vmatmul.f32.gmra.mxu0 %v2490
    %v2492 = vpop.f32.mrf.mxu0
    %v2493 = vadd.f32 %v2456, %v2492
    %2494 = vdwg.mxu0
    %v2495 = vmax.f32 %v2147, %v2493
    %2496 = vset.pattern.permute.xlu0 7
    %2497 = vperm.xlu0 %2496, %v42
    %v2498 = vpop.permute.xlu0 %2497
    %vm2499 = vcmp.eq.s32.totalorder %v2498, %v60
    %v2500 = vsel %vm2499, 1, 0
    %v2501 = vcvt.s32.f32 %v2500
    %v2502 = vand.u32 %v58, 4294901760
    %2503 = vmatpush.msra.mxu0 %v2502
    %v2504 = vand.u32 %v57, 4294901760
    %2505 = vmatpush.msra.mxu0 %v2504
    %v2506 = vand.u32 %v56, 4294901760
    %2507 = vmatpush.msra.mxu0 %v2506
    %v2508 = vand.u32 %v55, 4294901760
    %2509 = vmatpush.msra.mxu0 %v2508
    %v2510 = vand.u32 %v54, 4294901760
    %2511 = vmatpush.msra.mxu0 %v2510
    %v2512 = vand.u32 %v53, 4294901760
    %2513 = vmatpush.msra.mxu0 %v2512
    %v2514 = vand.u32 %v52, 4294901760
    %2515 = vmatpush.msra.mxu0 %v2514
    %v2516 = vand.u32 %v51, 4294901760
    %2517 = vmatpush.msra.mxu0 %v2516
    %v2518 = vand.u32 %v50, 4294901760
    %2519 = vmatpush.msra.mxu0 %v2518
    %v2520 = vand.u32 %v49, 4294901760
    %2521 = vmatpush.msra.mxu0 %v2520
    %v2522 = vand.u32 %v48, 4294901760
    %2523 = vmatpush.msra.mxu0 %v2522
    %v2524 = vand.u32 %v47, 4294901760
    %2525 = vmatpush.msra.mxu0 %v2524
    %v2526 = vand.u32 %v46, 4294901760
    %2527 = vmatpush.msra.mxu0 %v2526
    %v2528 = vand.u32 %v45, 4294901760
    %2529 = vmatpush.msra.mxu0 %v2528
    %v2530 = vand.u32 %v44, 4294901760
    %2531 = vmatpush.msra.mxu0 %v2530
    %v2532 = vand.u32 %v43, 4294901760
    %2533 = vmatpush.msra.mxu0 %v2532
    %v2534 = vand.u32 %v2501, 4294901760
    %v2535 = vsub.f32 %v2501, %v2534
    %v2536 = vand.u32 %v2535, 4294901760
    %v2537 = vsub.f32 %v2535, %v2536
    %v2538 = vand.u32 %v2537, 4294901760
    %2539 = vmatmul.f32.gmra.mxu0 %v2538
    %v2540 = vpop.f32.mrf.mxu0
    %v2541 = vadd.f32 0.0, %v2540
    %2542 = vdwg.mxu0
    %v2543 = vand.u32 %v58, 4294901760
    %v2544 = vsub.f32 %v58, %v2543
    %v2545 = vand.u32 %v2544, 4294901760
    %v2546 = vsub.f32 %v2544, %v2545
    %v2547 = vand.u32 %v2546, 4294901760
    %2548 = vmatpush.msra.mxu0 %v2547
    %v2549 = vand.u32 %v57, 4294901760
    %v2550 = vsub.f32 %v57, %v2549
    %v2551 = vand.u32 %v2550, 4294901760
    %v2552 = vsub.f32 %v2550, %v2551
    %v2553 = vand.u32 %v2552, 4294901760
    %2554 = vmatpush.msra.mxu0 %v2553
    %v2555 = vand.u32 %v56, 4294901760
    %v2556 = vsub.f32 %v56, %v2555
    %v2557 = vand.u32 %v2556, 4294901760
    %v2558 = vsub.f32 %v2556, %v2557
    %v2559 = vand.u32 %v2558, 4294901760
    %2560 = vmatpush.msra.mxu0 %v2559
    %v2561 = vand.u32 %v55, 4294901760
    %v2562 = vsub.f32 %v55, %v2561
    %v2563 = vand.u32 %v2562, 4294901760
    %v2564 = vsub.f32 %v2562, %v2563
    %v2565 = vand.u32 %v2564, 4294901760
    %2566 = vmatpush.msra.mxu0 %v2565
    %v2567 = vand.u32 %v54, 4294901760
    %v2568 = vsub.f32 %v54, %v2567
    %v2569 = vand.u32 %v2568, 4294901760
    %v2570 = vsub.f32 %v2568, %v2569
    %v2571 = vand.u32 %v2570, 4294901760
    %2572 = vmatpush.msra.mxu0 %v2571
    %v2573 = vand.u32 %v53, 4294901760
    %v2574 = vsub.f32 %v53, %v2573
    %v2575 = vand.u32 %v2574, 4294901760
    %v2576 = vsub.f32 %v2574, %v2575
    %v2577 = vand.u32 %v2576, 4294901760
    %2578 = vmatpush.msra.mxu0 %v2577
    %v2579 = vand.u32 %v52, 4294901760
    %v2580 = vsub.f32 %v52, %v2579
    %v2581 = vand.u32 %v2580, 4294901760
    %v2582 = vsub.f32 %v2580, %v2581
    %v2583 = vand.u32 %v2582, 4294901760
    %2584 = vmatpush.msra.mxu0 %v2583
    %v2585 = vand.u32 %v51, 4294901760
    %v2586 = vsub.f32 %v51, %v2585
    %v2587 = vand.u32 %v2586, 4294901760
    %v2588 = vsub.f32 %v2586, %v2587
    %v2589 = vand.u32 %v2588, 4294901760
    %2590 = vmatpush.msra.mxu0 %v2589
    %v2591 = vand.u32 %v50, 4294901760
    %v2592 = vsub.f32 %v50, %v2591
    %v2593 = vand.u32 %v2592, 4294901760
    %v2594 = vsub.f32 %v2592, %v2593
    %v2595 = vand.u32 %v2594, 4294901760
    %2596 = vmatpush.msra.mxu0 %v2595
    %v2597 = vand.u32 %v49, 4294901760
    %v2598 = vsub.f32 %v49, %v2597
    %v2599 = vand.u32 %v2598, 4294901760
    %v2600 = vsub.f32 %v2598, %v2599
    %v2601 = vand.u32 %v2600, 4294901760
    %2602 = vmatpush.msra.mxu0 %v2601
    %v2603 = vand.u32 %v48, 4294901760
    %v2604 = vsub.f32 %v48, %v2603
    %v2605 = vand.u32 %v2604, 4294901760
    %v2606 = vsub.f32 %v2604, %v2605
    %v2607 = vand.u32 %v2606, 4294901760
    %2608 = vmatpush.msra.mxu0 %v2607
    %v2609 = vand.u32 %v47, 4294901760
    %v2610 = vsub.f32 %v47, %v2609
    %v2611 = vand.u32 %v2610, 4294901760
    %v2612 = vsub.f32 %v2610, %v2611
    %v2613 = vand.u32 %v2612, 4294901760
    %2614 = vmatpush.msra.mxu0 %v2613
    %v2615 = vand.u32 %v46, 4294901760
    %v2616 = vsub.f32 %v46, %v2615
    %v2617 = vand.u32 %v2616, 4294901760
    %v2618 = vsub.f32 %v2616, %v2617
    %v2619 = vand.u32 %v2618, 4294901760
    %2620 = vmatpush.msra.mxu0 %v2619
    %v2621 = vand.u32 %v45, 4294901760
    %v2622 = vsub.f32 %v45, %v2621
    %v2623 = vand.u32 %v2622, 4294901760
    %v2624 = vsub.f32 %v2622, %v2623
    %v2625 = vand.u32 %v2624, 4294901760
    %2626 = vmatpush.msra.mxu0 %v2625
    %v2627 = vand.u32 %v44, 4294901760
    %v2628 = vsub.f32 %v44, %v2627
    %v2629 = vand.u32 %v2628, 4294901760
    %v2630 = vsub.f32 %v2628, %v2629
    %v2631 = vand.u32 %v2630, 4294901760
    %2632 = vmatpush.msra.mxu0 %v2631
    %v2633 = vand.u32 %v43, 4294901760
    %v2634 = vsub.f32 %v43, %v2633
    %v2635 = vand.u32 %v2634, 4294901760
    %v2636 = vsub.f32 %v2634, %v2635
    %v2637 = vand.u32 %v2636, 4294901760
    %2638 = vmatpush.msra.mxu0 %v2637
    %v2639 = vand.u32 %v2501, 4294901760
    %2640 = vmatmul.f32.gmra.mxu0 %v2639
    %v2641 = vpop.f32.mrf.mxu0
    %v2642 = vadd.f32 %v2541, %v2641
    %2643 = vdwg.mxu0
    %v2644 = vand.u32 %v58, 4294901760
    %v2645 = vsub.f32 %v58, %v2644
    %2646 = vmatpush.msra.mxu0 %v2645
    %v2647 = vand.u32 %v57, 4294901760
    %v2648 = vsub.f32 %v57, %v2647
    %2649 = vmatpush.msra.mxu0 %v2648
    %v2650 = vand.u32 %v56, 4294901760
    %v2651 = vsub.f32 %v56, %v2650
    %2652 = vmatpush.msra.mxu0 %v2651
    %v2653 = vand.u32 %v55, 4294901760
    %v2654 = vsub.f32 %v55, %v2653
    %2655 = vmatpush.msra.mxu0 %v2654
    %v2656 = vand.u32 %v54, 4294901760
    %v2657 = vsub.f32 %v54, %v2656
    %2658 = vmatpush.msra.mxu0 %v2657
    %v2659 = vand.u32 %v53, 4294901760
    %v2660 = vsub.f32 %v53, %v2659
    %2661 = vmatpush.msra.mxu0 %v2660
    %v2662 = vand.u32 %v52, 4294901760
    %v2663 = vsub.f32 %v52, %v2662
    %2664 = vmatpush.msra.mxu0 %v2663
    %v2665 = vand.u32 %v51, 4294901760
    %v2666 = vsub.f32 %v51, %v2665
    %2667 = vmatpush.msra.mxu0 %v2666
    %v2668 = vand.u32 %v50, 4294901760
    %v2669 = vsub.f32 %v50, %v2668
    %2670 = vmatpush.msra.mxu0 %v2669
    %v2671 = vand.u32 %v49, 4294901760
    %v2672 = vsub.f32 %v49, %v2671
    %2673 = vmatpush.msra.mxu0 %v2672
    %v2674 = vand.u32 %v48, 4294901760
    %v2675 = vsub.f32 %v48, %v2674
    %2676 = vmatpush.msra.mxu0 %v2675
    %v2677 = vand.u32 %v47, 4294901760
    %v2678 = vsub.f32 %v47, %v2677
    %2679 = vmatpush.msra.mxu0 %v2678
    %v2680 = vand.u32 %v46, 4294901760
    %v2681 = vsub.f32 %v46, %v2680
    %2682 = vmatpush.msra.mxu0 %v2681
    %v2683 = vand.u32 %v45, 4294901760
    %v2684 = vsub.f32 %v45, %v2683
    %2685 = vmatpush.msra.mxu0 %v2684
    %v2686 = vand.u32 %v44, 4294901760
    %v2687 = vsub.f32 %v44, %v2686
    %2688 = vmatpush.msra.mxu0 %v2687
    %v2689 = vand.u32 %v43, 4294901760
    %v2690 = vsub.f32 %v43, %v2689
    %2691 = vmatpush.msra.mxu0 %v2690
    %v2692 = vand.u32 %v2501, 4294901760
    %v2693 = vsub.f32 %v2501, %v2692
    %2694 = vmatmul.f32.gmra.mxu0 %v2693
    %v2695 = vpop.f32.mrf.mxu0
    %v2696 = vadd.f32 %v2642, %v2695
    %2697 = vdwg.mxu0
    %v2698 = vand.u32 %v58, 4294901760
    %2699 = vmatpush.msra.mxu0 %v2698
    %v2700 = vand.u32 %v57, 4294901760
    %2701 = vmatpush.msra.mxu0 %v2700
    %v2702 = vand.u32 %v56, 4294901760
    %2703 = vmatpush.msra.mxu0 %v2702
    %v2704 = vand.u32 %v55, 4294901760
    %2705 = vmatpush.msra.mxu0 %v2704
    %v2706 = vand.u32 %v54, 4294901760
    %2707 = vmatpush.msra.mxu0 %v2706
    %v2708 = vand.u32 %v53, 4294901760
    %2709 = vmatpush.msra.mxu0 %v2708
    %v2710 = vand.u32 %v52, 4294901760
    %2711 = vmatpush.msra.mxu0 %v2710
    %v2712 = vand.u32 %v51, 4294901760
    %2713 = vmatpush.msra.mxu0 %v2712
    %v2714 = vand.u32 %v50, 4294901760
    %2715 = vmatpush.msra.mxu0 %v2714
    %v2716 = vand.u32 %v49, 4294901760
    %2717 = vmatpush.msra.mxu0 %v2716
    %v2718 = vand.u32 %v48, 4294901760
    %2719 = vmatpush.msra.mxu0 %v2718
    %v2720 = vand.u32 %v47, 4294901760
    %2721 = vmatpush.msra.mxu0 %v2720
    %v2722 = vand.u32 %v46, 4294901760
    %2723 = vmatpush.msra.mxu0 %v2722
    %v2724 = vand.u32 %v45, 4294901760
    %2725 = vmatpush.msra.mxu0 %v2724
    %v2726 = vand.u32 %v44, 4294901760
    %2727 = vmatpush.msra.mxu0 %v2726
    %v2728 = vand.u32 %v43, 4294901760
    %2729 = vmatpush.msra.mxu0 %v2728
    %v2730 = vand.u32 %v2501, 4294901760
    %v2731 = vsub.f32 %v2501, %v2730
    %v2732 = vand.u32 %v2731, 4294901760
    %2733 = vmatmul.f32.gmra.mxu0 %v2732
    %v2734 = vpop.f32.mrf.mxu0
    %v2735 = vadd.f32 %v2696, %v2734
    %2736 = vdwg.mxu0
    %v2737 = vand.u32 %v58, 4294901760
    %v2738 = vsub.f32 %v58, %v2737
    %v2739 = vand.u32 %v2738, 4294901760
    %2740 = vmatpush.msra.mxu0 %v2739
    %v2741 = vand.u32 %v57, 4294901760
    %v2742 = vsub.f32 %v57, %v2741
    %v2743 = vand.u32 %v2742, 4294901760
    %2744 = vmatpush.msra.mxu0 %v2743
    %v2745 = vand.u32 %v56, 4294901760
    %v2746 = vsub.f32 %v56, %v2745
    %v2747 = vand.u32 %v2746, 4294901760
    %2748 = vmatpush.msra.mxu0 %v2747
    %v2749 = vand.u32 %v55, 4294901760
    %v2750 = vsub.f32 %v55, %v2749
    %v2751 = vand.u32 %v2750, 4294901760
    %2752 = vmatpush.msra.mxu0 %v2751
    %v2753 = vand.u32 %v54, 4294901760
    %v2754 = vsub.f32 %v54, %v2753
    %v2755 = vand.u32 %v2754, 4294901760
    %2756 = vmatpush.msra.mxu0 %v2755
    %v2757 = vand.u32 %v53, 4294901760
    %v2758 = vsub.f32 %v53, %v2757
    %v2759 = vand.u32 %v2758, 4294901760
    %2760 = vmatpush.msra.mxu0 %v2759
    %v2761 = vand.u32 %v52, 4294901760
    %v2762 = vsub.f32 %v52, %v2761
    %v2763 = vand.u32 %v2762, 4294901760
    %2764 = vmatpush.msra.mxu0 %v2763
    %v2765 = vand.u32 %v51, 4294901760
    %v2766 = vsub.f32 %v51, %v2765
    %v2767 = vand.u32 %v2766, 4294901760
    %2768 = vmatpush.msra.mxu0 %v2767
    %v2769 = vand.u32 %v50, 4294901760
    %v2770 = vsub.f32 %v50, %v2769
    %v2771 = vand.u32 %v2770, 4294901760
    %2772 = vmatpush.msra.mxu0 %v2771
    %v2773 = vand.u32 %v49, 4294901760
    %v2774 = vsub.f32 %v49, %v2773
    %v2775 = vand.u32 %v2774, 4294901760
    %2776 = vmatpush.msra.mxu0 %v2775
    %v2777 = vand.u32 %v48, 4294901760
    %v2778 = vsub.f32 %v48, %v2777
    %v2779 = vand.u32 %v2778, 4294901760
    %2780 = vmatpush.msra.mxu0 %v2779
    %v2781 = vand.u32 %v47, 4294901760
    %v2782 = vsub.f32 %v47, %v2781
    %v2783 = vand.u32 %v2782, 4294901760
    %2784 = vmatpush.msra.mxu0 %v2783
    %v2785 = vand.u32 %v46, 4294901760
    %v2786 = vsub.f32 %v46, %v2785
    %v2787 = vand.u32 %v2786, 4294901760
    %2788 = vmatpush.msra.mxu0 %v2787
    %v2789 = vand.u32 %v45, 4294901760
    %v2790 = vsub.f32 %v45, %v2789
    %v2791 = vand.u32 %v2790, 4294901760
    %2792 = vmatpush.msra.mxu0 %v2791
    %v2793 = vand.u32 %v44, 4294901760
    %v2794 = vsub.f32 %v44, %v2793
    %v2795 = vand.u32 %v2794, 4294901760
    %2796 = vmatpush.msra.mxu0 %v2795
    %v2797 = vand.u32 %v43, 4294901760
    %v2798 = vsub.f32 %v43, %v2797
    %v2799 = vand.u32 %v2798, 4294901760
    %2800 = vmatpush.msra.mxu0 %v2799
    %v2801 = vand.u32 %v2501, 4294901760
    %2802 = vmatmul.f32.gmra.mxu0 %v2801
    %v2803 = vpop.f32.mrf.mxu0
    %v2804 = vadd.f32 %v2735, %v2803
    %2805 = vdwg.mxu0
    %v2806 = vand.u32 %v58, 4294901760
    %2807 = vmatpush.msra.mxu0 %v2806
    %v2808 = vand.u32 %v57, 4294901760
    %2809 = vmatpush.msra.mxu0 %v2808
    %v2810 = vand.u32 %v56, 4294901760
    %2811 = vmatpush.msra.mxu0 %v2810
    %v2812 = vand.u32 %v55, 4294901760
    %2813 = vmatpush.msra.mxu0 %v2812
    %v2814 = vand.u32 %v54, 4294901760
    %2815 = vmatpush.msra.mxu0 %v2814
    %v2816 = vand.u32 %v53, 4294901760
    %2817 = vmatpush.msra.mxu0 %v2816
    %v2818 = vand.u32 %v52, 4294901760
    %2819 = vmatpush.msra.mxu0 %v2818
    %v2820 = vand.u32 %v51, 4294901760
    %2821 = vmatpush.msra.mxu0 %v2820
    %v2822 = vand.u32 %v50, 4294901760
    %2823 = vmatpush.msra.mxu0 %v2822
    %v2824 = vand.u32 %v49, 4294901760
    %2825 = vmatpush.msra.mxu0 %v2824
    %v2826 = vand.u32 %v48, 4294901760
    %2827 = vmatpush.msra.mxu0 %v2826
    %v2828 = vand.u32 %v47, 4294901760
    %2829 = vmatpush.msra.mxu0 %v2828
    %v2830 = vand.u32 %v46, 4294901760
    %2831 = vmatpush.msra.mxu0 %v2830
    %v2832 = vand.u32 %v45, 4294901760
    %2833 = vmatpush.msra.mxu0 %v2832
    %v2834 = vand.u32 %v44, 4294901760
    %2835 = vmatpush.msra.mxu0 %v2834
    %v2836 = vand.u32 %v43, 4294901760
    %2837 = vmatpush.msra.mxu0 %v2836
    %v2838 = vand.u32 %v2501, 4294901760
    %2839 = vmatmul.f32.gmra.mxu0 %v2838
    %v2840 = vpop.f32.mrf.mxu0
    %v2841 = vadd.f32 %v2804, %v2840
    %2842 = vdwg.mxu0
    %v2843 = vmax.f32 %v2495, %v2841
    %2844 = vst [vmem:[#allocation7] sm:$0xff] %v2843
    // Predicated region
    $region18: #{tpu_custom_call.1} parent=1 // pred_check
      _
    $region19: #{tpu_custom_call.1} parent=1 // pred_check_branch
      %2846 = sbr.rel (0) target = $region21
    $region20: #{tpu_custom_call.1} parent=1 // pred_region
      %2848 = vsyncadd [#allocation4], 0
      %s2850 = sshll.u32 [#allocation7], 4
      %s2851 = int_to_ptr.vmem [resolvable:$true] %s2850
      %s2852 = sshll.u32 %s2, 4
      %s2853 = int_to_ptr.hbm [resolvable:$true] %s2852
      %2855 = dma.vmem_to_hbm [thread:$0]  %s2851, 128, %s2853, [#allocation4]
    $region21: #{tpu_custom_call.1} parent=1 // pred_fallthru
      _
    // Predicated region
    $region22: #{tpu_custom_call.1} parent=1 // pred_check
      _
    $region23: #{tpu_custom_call.1} parent=1 // pred_check_branch
      %2857 = sbr.rel (0) target = $region25
    $region24: #{tpu_custom_call.1} parent=1 // pred_region
      %2859 = dma.done [#allocation4], 128
    $region25: #{tpu_custom_call.1} parent=1 // pred_fallthru
      _
    %2860 = vsyncpa [#allocation3], 1
    %2861 = vsyncpa [#allocation6], 1
    %2862 = vsyncpa [#allocation4], 1

</llo_original>
